<compile_context>
chip_gen: v5e
topology: v5e:2x2
jax: 0.10.0
libtpu: 0.0.40
codegen_flags: <defaults>
</compile_context>

<pallas_src>
import jax
import jax.numpy as jnp
import numpy as np
from jax.experimental import pallas as pl
from jax.experimental.pallas import tpu as pltpu


def _sigmoid(x):
    # tanh form: single EUP transcendental + 2 VPU ops, no exact divide on the
    # serial chain.  Mathematically identical to 1/(1+exp(-x)).
    return 0.5 * (jnp.tanh(0.5 * x) + 1.0)


def encoder_kernel(x_ref,        # (B, T1, I)   VMEM  driving series, batch-major
                   wah_ref,      # (1, H)       VMEM  attention weight on h
                   was_ref,      # (1, H)       VMEM  attention weight on s (cell)
                   wax_ref,      # (T1, 1)      VMEM  attention weight on X time axis
                   battn_ref,    # (1,)         SMEM  attention bias
                   wih_ref,      # (I, 4H)      VMEM  W_ih^T
                   whh_ref,      # (H, 4H)      VMEM  W_hh^T
                   b_ref,        # (1, 4H)      VMEM  b_ih + b_hh
                   xt_out_ref,   # (B, T1*I)    VMEM  X_tilde  (lane-flattened)
                   xe_out_ref):  # (B, T1*H)    VMEM  X_encoded (lane-dense, 256 lanes)
    B, T1, I = x_ref.shape
    H = wah_ref.shape[1]

    # hoisted loads (done once, reused every timestep)
    w_h = wah_ref[...]                  # (1, H)
    w_s = was_ref[...]                  # (1, H)
    w_ih = wih_ref[...]                 # (I, 4H)
    w_hh = whh_ref[...]                 # (H, 4H)
    bias = b_ref[...]                   # (1, 4H)
    x_all = x_ref[...]                  # (B, T1, I)

    # ---- time-invariant attention term (hoisted out of the recurrence) ------
    # score_x[b, i] = sum_t w_x[t] * X[b, t, i] + b_attn
    w_x = wax_ref[...]                  # (T1, 1)
    score_x = jnp.sum(x_all * w_x[None, :, :], axis=1)                 # (B, I)
    score_x = score_x + battn_ref[0]                                   # (B, I)

    # recurrent state carried as values (vregs), zero-initialised (== _init_states)
    h = jnp.zeros((B, H), jnp.float32)
    c = jnp.zeros((B, H), jnp.float32)

    for t in range(T1):                 # fully unrolled time recurrence
        # ---- input attention -------------------------------------------------
        # score[b, i] = w_h . h[b] + w_s . c[b] + score_x[b, i]
        score_hs = jnp.sum(h * w_h + c * w_s, axis=1, keepdims=True)   # (B, 1)
        score = score_hs + score_x                                     # (B, I)

        # softmax over the input_size dimension (approx reciprocal -> EUP slot)
        m = jnp.max(score, axis=1, keepdims=True)
        e = jnp.exp(score - m)
        denom = jnp.sum(e, axis=1, keepdims=True)
        alpha = e * pl.reciprocal(denom, approx=True)                  # (B, I)

        x_tilde = alpha * x_all[:, t, :]                               # (B, I)

        # ---- single LSTM cell step (gate order: i, f, g, o) -------------------
        # two MXU pushes, no lane concat; the h-path dot only depends on last
        # step's h so it can overlap the attention/softmax chain above.
        gates = (jnp.dot(x_tilde, w_ih, preferred_element_type=jnp.float32)
                 + jnp.dot(h, w_hh, preferred_element_type=jnp.float32)
                 + bias)                                               # (B, 4H)
        i_g = _sigmoid(gates[:, 0:H])
        f_g = _sigmoid(gates[:, H:2 * H])
        g_g = jnp.tanh(gates[:, 2 * H:3 * H])
        o_g = _sigmoid(gates[:, 3 * H:4 * H])
        c = f_g * c + i_g * g_g
        h = o_g * jnp.tanh(c)

        # VMEM-resident outputs (off the recurrence's critical path);
        # single lane-dense HBM writeback after the kernel finishes.
        xt_out_ref[:, t * I:(t + 1) * I] = x_tilde.astype(xt_out_ref.dtype)
        xe_out_ref[:, t * H:(t + 1) * H] = h.astype(xe_out_ref.dtype)


def encoder_forward(X, params):
    """X: (B, T-1, input_size) float32.  Returns (X_tilde, X_encoded)."""
    B, T1, I = X.shape
    W_attn = params["W_attn"]          # (1, 2H + T1)
    b_attn = params["b_attn"]          # (1,)
    W_ih = params["W_ih"]              # (4H, I)
    W_hh = params["W_hh"]              # (4H, H)
    b_ih = params["b_ih"]              # (4H,)
    b_hh = params["b_hh"]              # (4H,)
    H = W_hh.shape[1]

    # glue: parameter reshapes only (one-time, tiny); no activation transposes.
    Xf = X.astype(jnp.float32)                                          # (B, T1, I)
    w_h = W_attn[:, 0:H].astype(jnp.float32)                            # (1, H)
    w_s = W_attn[:, H:2 * H].astype(jnp.float32)                        # (1, H)
    w_x = W_attn[0, 2 * H:].reshape(T1, 1).astype(jnp.float32)          # (T1, 1)
    W_ihT = jnp.transpose(W_ih).astype(jnp.float32)                     # (I, 4H)
    W_hhT = jnp.transpose(W_hh).astype(jnp.float32)                     # (H, 4H)
    b_sum = (b_ih + b_hh).reshape(1, 4 * H).astype(jnp.float32)         # (1, 4H)

    vmem = pltpu.MemorySpace.VMEM
    smem = pltpu.MemorySpace.SMEM

    xt_flat, xe_flat = pl.pallas_call(
        encoder_kernel,
        out_shape=(jax.ShapeDtypeStruct((B, T1 * I), jnp.float32),
                   jax.ShapeDtypeStruct((B, T1 * H), jnp.float32)),
        in_specs=[
            pl.BlockSpec(memory_space=vmem),   # X (full array resident, batch-major)
            pl.BlockSpec(memory_space=vmem),   # w_h
            pl.BlockSpec(memory_space=vmem),   # w_s
            pl.BlockSpec(memory_space=vmem),   # w_x (time weights, vectorized)
            pl.BlockSpec(memory_space=smem),   # b_attn (scalar)
            pl.BlockSpec(memory_space=vmem),   # W_ih^T
            pl.BlockSpec(memory_space=vmem),   # W_hh^T
            pl.BlockSpec(memory_space=vmem),   # b_ih + b_hh
        ],
        out_specs=(pl.BlockSpec(memory_space=vmem),
                   pl.BlockSpec(memory_space=vmem)),
    )(Xf, w_h, w_s, w_x, b_attn.astype(jnp.float32), W_ihT, W_hhT, b_sum)

    # free reshapes back to the PyTorch (B, T-1, ...) convention
    return xt_flat.reshape(B, T1, I), xe_flat.reshape(B, T1, H)


def encoder_reference(X, params):
    """Pure-JAX mirror of the PyTorch forward (for verification)."""
    B, T1, I = X.shape
    W_attn, b_attn = params["W_attn"], params["b_attn"]
    W_ih, W_hh, b_ih, b_hh = params["W_ih"], params["W_hh"], params["b_ih"], params["b_hh"]
    H = W_hh.shape[1]
    h = jnp.zeros((B, H), jnp.float32)
    c = jnp.zeros((B, H), jnp.float32)
    X_tilde, X_enc = [], []
    for t in range(T1):
        feat = jnp.concatenate(
            [jnp.broadcast_to(h[:, None, :], (B, I, H)),
             jnp.broadcast_to(c[:, None, :], (B, I, H)),
             jnp.transpose(X, (0, 2, 1))], axis=2)                 # (B, I, 2H+T1)
        score = feat.reshape(-1, 2 * H + T1) @ W_attn.T + b_attn   # (B*I, 1)
        alpha = jax.nn.softmax(score.reshape(B, I), axis=1)
        x_tilde = alpha * X[:, t, :]
        gates = x_tilde @ W_ih.T + h @ W_hh.T + b_ih + b_hh
        i_g = jax.nn.sigmoid(gates[:, 0:H])
        f_g = jax.nn.sigmoid(gates[:, H:2 * H])
        g_g = jnp.tanh(gates[:, 2 * H:3 * H])
        o_g = jax.nn.sigmoid(gates[:, 3 * H:4 * H])
        c = f_g * c + i_g * g_g
        h = o_g * jnp.tanh(c)
        X_tilde.append(x_tilde)
        X_enc.append(h)
    return jnp.stack(X_tilde, axis=1), jnp.stack(X_enc, axis=1)


if __name__ == "__main__":
    # small shapes consistent with the module: T=9 => T-1=8 timesteps,
    # input_size=8 driving series, hidden=32, batch=4
    B, T, I, H = 4, 9, 8, 32
    T1 = T - 1

    key = jax.random.PRNGKey(0)
    ks = jax.random.split(key, 7)
    X = jax.random.normal(ks[0], (B, T1, I), jnp.float32)

    s_attn = 1.0 / float(np.sqrt(2 * H + T1))
    s_lstm = 1.0 / float(np.sqrt(H))
    params = {
        "W_attn": jax.random.uniform(ks[1], (1, 2 * H + T1), jnp.float32, -1.0, 1.0) * s_attn,
        "b_attn": jax.random.uniform(ks[2], (1,), jnp.float32, -1.0, 1.0) * s_attn,
        "W_ih":   jax.random.uniform(ks[3], (4 * H, I), jnp.float32, -1.0, 1.0) * s_lstm,
        "W_hh":   jax.random.uniform(ks[4], (4 * H, H), jnp.float32, -1.0, 1.0) * s_lstm,
        "b_ih":   jax.random.uniform(ks[5], (4 * H,), jnp.float32, -1.0, 1.0) * s_lstm,
        "b_hh":   jax.random.uniform(ks[6], (4 * H,), jnp.float32, -1.0, 1.0) * s_lstm,
    }

    x_tilde, x_encoded = encoder_forward(X, params)
    jax.block_until_ready((x_tilde, x_encoded))

    ref_tilde, ref_encoded = encoder_reference(X, params)
    # tolerance accounts for the EUP approximate reciprocal in the softmax
    # denominator and the tanh-form sigmoid.
    np.testing.assert_allclose(np.asarray(x_tilde), np.asarray(ref_tilde),
                               rtol=2e-3, atol=5e-4)
    np.testing.assert_allclose(np.asarray(x_encoded), np.asarray(ref_encoded),
                               rtol=2e-3, atol=5e-4)
    assert x_tilde.shape == (B, T1, I) and x_encoded.shape == (B, T1, H)

    print("KERNEL_OK")
</pallas_src>

<mosaic_0001>
module attributes {stable_mosaic.version = 11 : i64} {
  func.func @encoder_kernel(%arg0: memref<4x8x8xf32, #tpu.memory_space<vmem>>, %arg1: memref<1x32xf32, #tpu.memory_space<vmem>>, %arg2: memref<1x32xf32, #tpu.memory_space<vmem>>, %arg3: memref<8x1xf32, #tpu.memory_space<vmem>>, %arg4: memref<1xf32, #tpu.memory_space<smem>>, %arg5: memref<8x128xf32, #tpu.memory_space<vmem>>, %arg6: memref<32x128xf32, #tpu.memory_space<vmem>>, %arg7: memref<1x128xf32, #tpu.memory_space<vmem>>, %arg8: memref<4x64xf32, #tpu.memory_space<vmem>>, %arg9: memref<4x256xf32, #tpu.memory_space<vmem>>) attributes {dimension_semantics = [], scalar_prefetch = 0 : i64, scratch_operands = 0 : i64, tpu.core_type = #tpu.core_type<tc>} {
    %c0 = arith.constant 0 : index
    %c0_0 = arith.constant 0 : index
    %0 = vector.load %arg1[%c0, %c0_0] : memref<1x32xf32, #tpu.memory_space<vmem>>, vector<1x32xf32>
    %c0_1 = arith.constant 0 : index
    %c0_2 = arith.constant 0 : index
    %1 = vector.load %arg2[%c0_1, %c0_2] : memref<1x32xf32, #tpu.memory_space<vmem>>, vector<1x32xf32>
    %c0_3 = arith.constant 0 : index
    %c0_4 = arith.constant 0 : index
    %2 = vector.load %arg5[%c0_3, %c0_4] : memref<8x128xf32, #tpu.memory_space<vmem>>, vector<8x128xf32>
    %c0_5 = arith.constant 0 : index
    %c0_6 = arith.constant 0 : index
    %3 = vector.load %arg6[%c0_5, %c0_6] : memref<32x128xf32, #tpu.memory_space<vmem>>, vector<32x128xf32>
    %c0_7 = arith.constant 0 : index
    %c0_8 = arith.constant 0 : index
    %4 = vector.load %arg7[%c0_7, %c0_8] : memref<1x128xf32, #tpu.memory_space<vmem>>, vector<1x128xf32>
    %c0_9 = arith.constant 0 : index
    %c0_10 = arith.constant 0 : index
    %c0_11 = arith.constant 0 : index
    %5 = vector.load %arg0[%c0_9, %c0_10, %c0_11] : memref<4x8x8xf32, #tpu.memory_space<vmem>>, vector<4x8x8xf32>
    %c0_12 = arith.constant 0 : index
    %c0_13 = arith.constant 0 : index
    %6 = vector.load %arg3[%c0_12, %c0_13] : memref<8x1xf32, #tpu.memory_space<vmem>>, vector<8x1xf32>
    %7 = vector.shape_cast %6 : vector<8x1xf32> to vector<1x8x1xf32>
    %8 = vector.broadcast %7 : vector<1x8x1xf32> to vector<4x8x8xf32>
    %9 = arith.mulf %5, %8 : vector<4x8x8xf32>
    %cst = arith.constant dense<0.000000e+00> : vector<4x8xf32>
    %10 = vector.multi_reduction <add>, %9, %cst [1] : vector<4x8x8xf32> to vector<4x8xf32>
    %c0_14 = arith.constant 0 : index
    %11 = memref.load %arg4[%c0_14] : memref<1xf32, #tpu.memory_space<smem>>
    %12 = vector.broadcast %11 : f32 to vector<4x8xf32>
    %13 = arith.addf %10, %12 : vector<4x8xf32>
    %cst_15 = arith.constant 0.000000e+00 : f32
    %14 = vector.broadcast %cst_15 : f32 to vector<4x32xf32>
    %cst_16 = arith.constant 0.000000e+00 : f32
    %15 = vector.broadcast %cst_16 : f32 to vector<4x32xf32>
    %16 = vector.broadcast %0 : vector<1x32xf32> to vector<4x32xf32>
    %17 = arith.mulf %14, %16 : vector<4x32xf32>
    %18 = vector.broadcast %1 : vector<1x32xf32> to vector<4x32xf32>
    %19 = arith.mulf %15, %18 : vector<4x32xf32>
    %20 = arith.addf %17, %19 : vector<4x32xf32>
    %cst_17 = arith.constant dense<0.000000e+00> : vector<4xf32>
    %21 = vector.multi_reduction <add>, %20, %cst_17 [1] : vector<4x32xf32> to vector<4xf32>
    %22 = vector.shape_cast %21 : vector<4xf32> to vector<4x1xf32>
    %23 = vector.broadcast %22 : vector<4x1xf32> to vector<4x8xf32>
    %24 = arith.addf %23, %13 : vector<4x8xf32>
    %cst_18 = arith.constant dense<0xFF800000> : vector<4xf32>
    %25 = vector.multi_reduction <maximumf>, %24, %cst_18 [1] : vector<4x8xf32> to vector<4xf32>
    %26 = vector.shape_cast %25 : vector<4xf32> to vector<4x1xf32>
    %27 = vector.broadcast %26 : vector<4x1xf32> to vector<4x8xf32>
    %28 = arith.subf %24, %27 : vector<4x8xf32>
    %29 = math.exp %28 : vector<4x8xf32>
    %cst_19 = arith.constant dense<0.000000e+00> : vector<4xf32>
    %30 = vector.multi_reduction <add>, %29, %cst_19 [1] : vector<4x8xf32> to vector<4xf32>
    %31 = vector.shape_cast %30 : vector<4xf32> to vector<4x1xf32>
    %32 = tpu.reciprocal %31 {approx = true} : vector<4x1xf32> -> vector<4x1xf32>
    %33 = vector.broadcast %32 : vector<4x1xf32> to vector<4x8xf32>
    %34 = arith.mulf %29, %33 : vector<4x8xf32>
    %35 = vector.extract_strided_slice %5 {offsets = [0, 0, 0], sizes = [4, 1, 8], strides = [1, 1, 1]} : vector<4x8x8xf32> to vector<4x1x8xf32>
    %36 = vector.shape_cast %35 : vector<4x1x8xf32> to vector<4x8xf32>
    %37 = arith.mulf %34, %36 : vector<4x8xf32>
    %cst_20 = arith.constant dense<0.000000e+00> : vector<4x128xf32>
    %38 = tpu.matmul %37, %2, %cst_20 {dimension_numbers = #tpu.dot_dimension_numbers<[1], [0], [0], [1], [0, 0, 1, 1], [], []>} : vector<4x8xf32>, vector<8x128xf32>, vector<4x128xf32> -> vector<4x128xf32>
    %cst_21 = arith.constant dense<0.000000e+00> : vector<4x128xf32>
    %39 = tpu.matmul %14, %3, %cst_21 {dimension_numbers = #tpu.dot_dimension_numbers<[1], [0], [0], [1], [0, 0, 1, 1], [], []>} : vector<4x32xf32>, vector<32x128xf32>, vector<4x128xf32> -> vector<4x128xf32>
    %40 = arith.addf %38, %39 : vector<4x128xf32>
    %41 = vector.broadcast %4 : vector<1x128xf32> to vector<4x128xf32>
    %42 = arith.addf %40, %41 : vector<4x128xf32>
    %43 = vector.extract_strided_slice %42 {offsets = [0, 0], sizes = [4, 32], strides = [1, 1]} : vector<4x128xf32> to vector<4x32xf32>
    %cst_22 = arith.constant 5.000000e-01 : f32
    %44 = vector.broadcast %cst_22 : f32 to vector<4x32xf32>
    %45 = arith.mulf %44, %43 : vector<4x32xf32>
    %46 = math.tanh %45 : vector<4x32xf32>
    %cst_23 = arith.constant 1.000000e+00 : f32
    %47 = vector.broadcast %cst_23 : f32 to vector<4x32xf32>
    %48 = arith.addf %46, %47 : vector<4x32xf32>
    %cst_24 = arith.constant 5.000000e-01 : f32
    %49 = vector.broadcast %cst_24 : f32 to vector<4x32xf32>
    %50 = arith.mulf %49, %48 : vector<4x32xf32>
    %51 = vector.extract_strided_slice %42 {offsets = [0, 32], sizes = [4, 32], strides = [1, 1]} : vector<4x128xf32> to vector<4x32xf32>
    %cst_25 = arith.constant 5.000000e-01 : f32
    %52 = vector.broadcast %cst_25 : f32 to vector<4x32xf32>
    %53 = arith.mulf %52, %51 : vector<4x32xf32>
    %54 = math.tanh %53 : vector<4x32xf32>
    %cst_26 = arith.constant 1.000000e+00 : f32
    %55 = vector.broadcast %cst_26 : f32 to vector<4x32xf32>
    %56 = arith.addf %54, %55 : vector<4x32xf32>
    %cst_27 = arith.constant 5.000000e-01 : f32
    %57 = vector.broadcast %cst_27 : f32 to vector<4x32xf32>
    %58 = arith.mulf %57, %56 : vector<4x32xf32>
    %59 = vector.extract_strided_slice %42 {offsets = [0, 64], sizes = [4, 32], strides = [1, 1]} : vector<4x128xf32> to vector<4x32xf32>
    %60 = math.tanh %59 : vector<4x32xf32>
    %61 = vector.extract_strided_slice %42 {offsets = [0, 96], sizes = [4, 32], strides = [1, 1]} : vector<4x128xf32> to vector<4x32xf32>
    %cst_28 = arith.constant 5.000000e-01 : f32
    %62 = vector.broadcast %cst_28 : f32 to vector<4x32xf32>
    %63 = arith.mulf %62, %61 : vector<4x32xf32>
    %64 = math.tanh %63 : vector<4x32xf32>
    %cst_29 = arith.constant 1.000000e+00 : f32
    %65 = vector.broadcast %cst_29 : f32 to vector<4x32xf32>
    %66 = arith.addf %64, %65 : vector<4x32xf32>
    %cst_30 = arith.constant 5.000000e-01 : f32
    %67 = vector.broadcast %cst_30 : f32 to vector<4x32xf32>
    %68 = arith.mulf %67, %66 : vector<4x32xf32>
    %69 = arith.mulf %58, %15 : vector<4x32xf32>
    %70 = arith.mulf %50, %60 : vector<4x32xf32>
    %71 = arith.addf %69, %70 : vector<4x32xf32>
    %72 = math.tanh %71 : vector<4x32xf32>
    %73 = arith.mulf %68, %72 : vector<4x32xf32>
    %c0_31 = arith.constant 0 : index
    %c0_32 = arith.constant 0 : index
    %74 = vector.load %arg8[%c0_31, %c0_32] : memref<4x64xf32, #tpu.memory_space<vmem>>, vector<4x8xf32>
    tpu.vector_store %arg8[%c0_31, %c0_32], %37 {strides = array<i32>} : memref<4x64xf32, #tpu.memory_space<vmem>>, vector<4x8xf32>,
    %c0_33 = arith.constant 0 : index
    %c0_34 = arith.constant 0 : index
    %75 = vector.load %arg9[%c0_33, %c0_34] : memref<4x256xf32, #tpu.memory_space<vmem>>, vector<4x32xf32>
    tpu.vector_store %arg9[%c0_33, %c0_34], %73 {strides = array<i32>} : memref<4x256xf32, #tpu.memory_space<vmem>>, vector<4x32xf32>,
    %76 = vector.broadcast %0 : vector<1x32xf32> to vector<4x32xf32>
    %77 = arith.mulf %73, %76 : vector<4x32xf32>
    %78 = vector.broadcast %1 : vector<1x32xf32> to vector<4x32xf32>
    %79 = arith.mulf %71, %78 : vector<4x32xf32>
    %80 = arith.addf %77, %79 : vector<4x32xf32>
    %cst_35 = arith.constant dense<0.000000e+00> : vector<4xf32>
    %81 = vector.multi_reduction <add>, %80, %cst_35 [1] : vector<4x32xf32> to vector<4xf32>
    %82 = vector.shape_cast %81 : vector<4xf32> to vector<4x1xf32>
    %83 = vector.broadcast %82 : vector<4x1xf32> to vector<4x8xf32>
    %84 = arith.addf %83, %13 : vector<4x8xf32>
    %cst_36 = arith.constant dense<0xFF800000> : vector<4xf32>
    %85 = vector.multi_reduction <maximumf>, %84, %cst_36 [1] : vector<4x8xf32> to vector<4xf32>
    %86 = vector.shape_cast %85 : vector<4xf32> to vector<4x1xf32>
    %87 = vector.broadcast %86 : vector<4x1xf32> to vector<4x8xf32>
    %88 = arith.subf %84, %87 : vector<4x8xf32>
    %89 = math.exp %88 : vector<4x8xf32>
    %cst_37 = arith.constant dense<0.000000e+00> : vector<4xf32>
    %90 = vector.multi_reduction <add>, %89, %cst_37 [1] : vector<4x8xf32> to vector<4xf32>
    %91 = vector.shape_cast %90 : vector<4xf32> to vector<4x1xf32>
    %92 = tpu.reciprocal %91 {approx = true} : vector<4x1xf32> -> vector<4x1xf32>
    %93 = vector.broadcast %92 : vector<4x1xf32> to vector<4x8xf32>
    %94 = arith.mulf %89, %93 : vector<4x8xf32>
    %95 = vector.extract_strided_slice %5 {offsets = [0, 1, 0], sizes = [4, 1, 8], strides = [1, 1, 1]} : vector<4x8x8xf32> to vector<4x1x8xf32>
    %96 = vector.shape_cast %95 : vector<4x1x8xf32> to vector<4x8xf32>
    %97 = arith.mulf %94, %96 : vector<4x8xf32>
    %cst_38 = arith.constant dense<0.000000e+00> : vector<4x128xf32>
    %98 = tpu.matmul %97, %2, %cst_38 {dimension_numbers = #tpu.dot_dimension_numbers<[1], [0], [0], [1], [0, 0, 1, 1], [], []>} : vector<4x8xf32>, vector<8x128xf32>, vector<4x128xf32> -> vector<4x128xf32>
    %cst_39 = arith.constant dense<0.000000e+00> : vector<4x128xf32>
    %99 = tpu.matmul %73, %3, %cst_39 {dimension_numbers = #tpu.dot_dimension_numbers<[1], [0], [0], [1], [0, 0, 1, 1], [], []>} : vector<4x32xf32>, vector<32x128xf32>, vector<4x128xf32> -> vector<4x128xf32>
    %100 = arith.addf %98, %99 : vector<4x128xf32>
    %101 = vector.broadcast %4 : vector<1x128xf32> to vector<4x128xf32>
    %102 = arith.addf %100, %101 : vector<4x128xf32>
    %103 = vector.extract_strided_slice %102 {offsets = [0, 0], sizes = [4, 32], strides = [1, 1]} : vector<4x128xf32> to vector<4x32xf32>
    %cst_40 = arith.constant 5.000000e-01 : f32
    %104 = vector.broadcast %cst_40 : f32 to vector<4x32xf32>
    %105 = arith.mulf %104, %103 : vector<4x32xf32>
    %106 = math.tanh %105 : vector<4x32xf32>
    %cst_41 = arith.constant 1.000000e+00 : f32
    %107 = vector.broadcast %cst_41 : f32 to vector<4x32xf32>
    %108 = arith.addf %106, %107 : vector<4x32xf32>
    %cst_42 = arith.constant 5.000000e-01 : f32
    %109 = vector.broadcast %cst_42 : f32 to vector<4x32xf32>
    %110 = arith.mulf %109, %108 : vector<4x32xf32>
    %111 = vector.extract_strided_slice %102 {offsets = [0, 32], sizes = [4, 32], strides = [1, 1]} : vector<4x128xf32> to vector<4x32xf32>
    %cst_43 = arith.constant 5.000000e-01 : f32
    %112 = vector.broadcast %cst_43 : f32 to vector<4x32xf32>
    %113 = arith.mulf %112, %111 : vector<4x32xf32>
    %114 = math.tanh %113 : vector<4x32xf32>
    %cst_44 = arith.constant 1.000000e+00 : f32
    %115 = vector.broadcast %cst_44 : f32 to vector<4x32xf32>
    %116 = arith.addf %114, %115 : vector<4x32xf32>
    %cst_45 = arith.constant 5.000000e-01 : f32
    %117 = vector.broadcast %cst_45 : f32 to vector<4x32xf32>
    %118 = arith.mulf %117, %116 : vector<4x32xf32>
    %119 = vector.extract_strided_slice %102 {offsets = [0, 64], sizes = [4, 32], strides = [1, 1]} : vector<4x128xf32> to vector<4x32xf32>
    %120 = math.tanh %119 : vector<4x32xf32>
    %121 = vector.extract_strided_slice %102 {offsets = [0, 96], sizes = [4, 32], strides = [1, 1]} : vector<4x128xf32> to vector<4x32xf32>
    %cst_46 = arith.constant 5.000000e-01 : f32
    %122 = vector.broadcast %cst_46 : f32 to vector<4x32xf32>
    %123 = arith.mulf %122, %121 : vector<4x32xf32>
    %124 = math.tanh %123 : vector<4x32xf32>
    %cst_47 = arith.constant 1.000000e+00 : f32
    %125 = vector.broadcast %cst_47 : f32 to vector<4x32xf32>
    %126 = arith.addf %124, %125 : vector<4x32xf32>
    %cst_48 = arith.constant 5.000000e-01 : f32
    %127 = vector.broadcast %cst_48 : f32 to vector<4x32xf32>
    %128 = arith.mulf %127, %126 : vector<4x32xf32>
    %129 = arith.mulf %118, %71 : vector<4x32xf32>
    %130 = arith.mulf %110, %120 : vector<4x32xf32>
    %131 = arith.addf %129, %130 : vector<4x32xf32>
    %132 = math.tanh %131 : vector<4x32xf32>
    %133 = arith.mulf %128, %132 : vector<4x32xf32>
    %c0_49 = arith.constant 0 : index
    %c8 = arith.constant 8 : index
    %134 = vector.load %arg8[%c0_49, %c8] : memref<4x64xf32, #tpu.memory_space<vmem>>, vector<4x8xf32>
    tpu.vector_store %arg8[%c0_49, %c8], %97 {strides = array<i32>} : memref<4x64xf32, #tpu.memory_space<vmem>>, vector<4x8xf32>,
    %c0_50 = arith.constant 0 : index
    %c32 = arith.constant 32 : index
    %135 = vector.load %arg9[%c0_50, %c32] : memref<4x256xf32, #tpu.memory_space<vmem>>, vector<4x32xf32>
    tpu.vector_store %arg9[%c0_50, %c32], %133 {strides = array<i32>} : memref<4x256xf32, #tpu.memory_space<vmem>>, vector<4x32xf32>,
    %136 = vector.broadcast %0 : vector<1x32xf32> to vector<4x32xf32>
    %137 = arith.mulf %133, %136 : vector<4x32xf32>
    %138 = vector.broadcast %1 : vector<1x32xf32> to vector<4x32xf32>
    %139 = arith.mulf %131, %138 : vector<4x32xf32>
    %140 = arith.addf %137, %139 : vector<4x32xf32>
    %cst_51 = arith.constant dense<0.000000e+00> : vector<4xf32>
    %141 = vector.multi_reduction <add>, %140, %cst_51 [1] : vector<4x32xf32> to vector<4xf32>
    %142 = vector.shape_cast %141 : vector<4xf32> to vector<4x1xf32>
    %143 = vector.broadcast %142 : vector<4x1xf32> to vector<4x8xf32>
    %144 = arith.addf %143, %13 : vector<4x8xf32>
    %cst_52 = arith.constant dense<0xFF800000> : vector<4xf32>
    %145 = vector.multi_reduction <maximumf>, %144, %cst_52 [1] : vector<4x8xf32> to vector<4xf32>
    %146 = vector.shape_cast %145 : vector<4xf32> to vector<4x1xf32>
    %147 = vector.broadcast %146 : vector<4x1xf32> to vector<4x8xf32>
    %148 = arith.subf %144, %147 : vector<4x8xf32>
    %149 = math.exp %148 : vector<4x8xf32>
    %cst_53 = arith.constant dense<0.000000e+00> : vector<4xf32>
    %150 = vector.multi_reduction <add>, %149, %cst_53 [1] : vector<4x8xf32> to vector<4xf32>
    %151 = vector.shape_cast %150 : vector<4xf32> to vector<4x1xf32>
    %152 = tpu.reciprocal %151 {approx = true} : vector<4x1xf32> -> vector<4x1xf32>
    %153 = vector.broadcast %152 : vector<4x1xf32> to vector<4x8xf32>
    %154 = arith.mulf %149, %153 : vector<4x8xf32>
    %155 = vector.extract_strided_slice %5 {offsets = [0, 2, 0], sizes = [4, 1, 8], strides = [1, 1, 1]} : vector<4x8x8xf32> to vector<4x1x8xf32>
    %156 = vector.shape_cast %155 : vector<4x1x8xf32> to vector<4x8xf32>
    %157 = arith.mulf %154, %156 : vector<4x8xf32>
    %cst_54 = arith.constant dense<0.000000e+00> : vector<4x128xf32>
    %158 = tpu.matmul %157, %2, %cst_54 {dimension_numbers = #tpu.dot_dimension_numbers<[1], [0], [0], [1], [0, 0, 1, 1], [], []>} : vector<4x8xf32>, vector<8x128xf32>, vector<4x128xf32> -> vector<4x128xf32>
    %cst_55 = arith.constant dense<0.000000e+00> : vector<4x128xf32>
    %159 = tpu.matmul %133, %3, %cst_55 {dimension_numbers = #tpu.dot_dimension_numbers<[1], [0], [0], [1], [0, 0, 1, 1], [], []>} : vector<4x32xf32>, vector<32x128xf32>, vector<4x128xf32> -> vector<4x128xf32>
    %160 = arith.addf %158, %159 : vector<4x128xf32>
    %161 = vector.broadcast %4 : vector<1x128xf32> to vector<4x128xf32>
    %162 = arith.addf %160, %161 : vector<4x128xf32>
    %163 = vector.extract_strided_slice %162 {offsets = [0, 0], sizes = [4, 32], strides = [1, 1]} : vector<4x128xf32> to vector<4x32xf32>
    %cst_56 = arith.constant 5.000000e-01 : f32
    %164 = vector.broadcast %cst_56 : f32 to vector<4x32xf32>
    %165 = arith.mulf %164, %163 : vector<4x32xf32>
    %166 = math.tanh %165 : vector<4x32xf32>
    %cst_57 = arith.constant 1.000000e+00 : f32
    %167 = vector.broadcast %cst_57 : f32 to vector<4x32xf32>
    %168 = arith.addf %166, %167 : vector<4x32xf32>
    %cst_58 = arith.constant 5.000000e-01 : f32
    %169 = vector.broadcast %cst_58 : f32 to vector<4x32xf32>
    %170 = arith.mulf %169, %168 : vector<4x32xf32>
    %171 = vector.extract_strided_slice %162 {offsets = [0, 32], sizes = [4, 32], strides = [1, 1]} : vector<4x128xf32> to vector<4x32xf32>
    %cst_59 = arith.constant 5.000000e-01 : f32
    %172 = vector.broadcast %cst_59 : f32 to vector<4x32xf32>
    %173 = arith.mulf %172, %171 : vector<4x32xf32>
    %174 = math.tanh %173 : vector<4x32xf32>
    %cst_60 = arith.constant 1.000000e+00 : f32
    %175 = vector.broadcast %cst_60 : f32 to vector<4x32xf32>
    %176 = arith.addf %174, %175 : vector<4x32xf32>
    %cst_61 = arith.constant 5.000000e-01 : f32
    %177 = vector.broadcast %cst_61 : f32 to vector<4x32xf32>
    %178 = arith.mulf %177, %176 : vector<4x32xf32>
    %179 = vector.extract_strided_slice %162 {offsets = [0, 64], sizes = [4, 32], strides = [1, 1]} : vector<4x128xf32> to vector<4x32xf32>
    %180 = math.tanh %179 : vector<4x32xf32>
    %181 = vector.extract_strided_slice %162 {offsets = [0, 96], sizes = [4, 32], strides = [1, 1]} : vector<4x128xf32> to vector<4x32xf32>
    %cst_62 = arith.constant 5.000000e-01 : f32
    %182 = vector.broadcast %cst_62 : f32 to vector<4x32xf32>
    %183 = arith.mulf %182, %181 : vector<4x32xf32>
    %184 = math.tanh %183 : vector<4x32xf32>
    %cst_63 = arith.constant 1.000000e+00 : f32
    %185 = vector.broadcast %cst_63 : f32 to vector<4x32xf32>
    %186 = arith.addf %184, %185 : vector<4x32xf32>
    %cst_64 = arith.constant 5.000000e-01 : f32
    %187 = vector.broadcast %cst_64 : f32 to vector<4x32xf32>
    %188 = arith.mulf %187, %186 : vector<4x32xf32>
    %189 = arith.mulf %178, %131 : vector<4x32xf32>
    %190 = arith.mulf %170, %180 : vector<4x32xf32>
    %191 = arith.addf %189, %190 : vector<4x32xf32>
    %192 = math.tanh %191 : vector<4x32xf32>
    %193 = arith.mulf %188, %192 : vector<4x32xf32>
    %c0_65 = arith.constant 0 : index
    %c16 = arith.constant 16 : index
    %194 = vector.load %arg8[%c0_65, %c16] : memref<4x64xf32, #tpu.memory_space<vmem>>, vector<4x8xf32>
    tpu.vector_store %arg8[%c0_65, %c16], %157 {strides = array<i32>} : memref<4x64xf32, #tpu.memory_space<vmem>>, vector<4x8xf32>,
    %c0_66 = arith.constant 0 : index
    %c64 = arith.constant 64 : index
    %195 = vector.load %arg9[%c0_66, %c64] : memref<4x256xf32, #tpu.memory_space<vmem>>, vector<4x32xf32>
    tpu.vector_store %arg9[%c0_66, %c64], %193 {strides = array<i32>} : memref<4x256xf32, #tpu.memory_space<vmem>>, vector<4x32xf32>,
    %196 = vector.broadcast %0 : vector<1x32xf32> to vector<4x32xf32>
    %197 = arith.mulf %193, %196 : vector<4x32xf32>
    %198 = vector.broadcast %1 : vector<1x32xf32> to vector<4x32xf32>
    %199 = arith.mulf %191, %198 : vector<4x32xf32>
    %200 = arith.addf %197, %199 : vector<4x32xf32>
    %cst_67 = arith.constant dense<0.000000e+00> : vector<4xf32>
    %201 = vector.multi_reduction <add>, %200, %cst_67 [1] : vector<4x32xf32> to vector<4xf32>
    %202 = vector.shape_cast %201 : vector<4xf32> to vector<4x1xf32>
    %203 = vector.broadcast %202 : vector<4x1xf32> to vector<4x8xf32>
    %204 = arith.addf %203, %13 : vector<4x8xf32>
    %cst_68 = arith.constant dense<0xFF800000> : vector<4xf32>
    %205 = vector.multi_reduction <maximumf>, %204, %cst_68 [1] : vector<4x8xf32> to vector<4xf32>
    %206 = vector.shape_cast %205 : vector<4xf32> to vector<4x1xf32>
    %207 = vector.broadcast %206 : vector<4x1xf32> to vector<4x8xf32>
    %208 = arith.subf %204, %207 : vector<4x8xf32>
    %209 = math.exp %208 : vector<4x8xf32>
    %cst_69 = arith.constant dense<0.000000e+00> : vector<4xf32>
    %210 = vector.multi_reduction <add>, %209, %cst_69 [1] : vector<4x8xf32> to vector<4xf32>
    %211 = vector.shape_cast %210 : vector<4xf32> to vector<4x1xf32>
    %212 = tpu.reciprocal %211 {approx = true} : vector<4x1xf32> -> vector<4x1xf32>
    %213 = vector.broadcast %212 : vector<4x1xf32> to vector<4x8xf32>
    %214 = arith.mulf %209, %213 : vector<4x8xf32>
    %215 = vector.extract_strided_slice %5 {offsets = [0, 3, 0], sizes = [4, 1, 8], strides = [1, 1, 1]} : vector<4x8x8xf32> to vector<4x1x8xf32>
    %216 = vector.shape_cast %215 : vector<4x1x8xf32> to vector<4x8xf32>
    %217 = arith.mulf %214, %216 : vector<4x8xf32>
    %cst_70 = arith.constant dense<0.000000e+00> : vector<4x128xf32>
    %218 = tpu.matmul %217, %2, %cst_70 {dimension_numbers = #tpu.dot_dimension_numbers<[1], [0], [0], [1], [0, 0, 1, 1], [], []>} : vector<4x8xf32>, vector<8x128xf32>, vector<4x128xf32> -> vector<4x128xf32>
    %cst_71 = arith.constant dense<0.000000e+00> : vector<4x128xf32>
    %219 = tpu.matmul %193, %3, %cst_71 {dimension_numbers = #tpu.dot_dimension_numbers<[1], [0], [0], [1], [0, 0, 1, 1], [], []>} : vector<4x32xf32>, vector<32x128xf32>, vector<4x128xf32> -> vector<4x128xf32>
    %220 = arith.addf %218, %219 : vector<4x128xf32>
    %221 = vector.broadcast %4 : vector<1x128xf32> to vector<4x128xf32>
    %222 = arith.addf %220, %221 : vector<4x128xf32>
    %223 = vector.extract_strided_slice %222 {offsets = [0, 0], sizes = [4, 32], strides = [1, 1]} : vector<4x128xf32> to vector<4x32xf32>
    %cst_72 = arith.constant 5.000000e-01 : f32
    %224 = vector.broadcast %cst_72 : f32 to vector<4x32xf32>
    %225 = arith.mulf %224, %223 : vector<4x32xf32>
    %226 = math.tanh %225 : vector<4x32xf32>
    %cst_73 = arith.constant 1.000000e+00 : f32
    %227 = vector.broadcast %cst_73 : f32 to vector<4x32xf32>
    %228 = arith.addf %226, %227 : vector<4x32xf32>
    %cst_74 = arith.constant 5.000000e-01 : f32
    %229 = vector.broadcast %cst_74 : f32 to vector<4x32xf32>
    %230 = arith.mulf %229, %228 : vector<4x32xf32>
    %231 = vector.extract_strided_slice %222 {offsets = [0, 32], sizes = [4, 32], strides = [1, 1]} : vector<4x128xf32> to vector<4x32xf32>
    %cst_75 = arith.constant 5.000000e-01 : f32
    %232 = vector.broadcast %cst_75 : f32 to vector<4x32xf32>
    %233 = arith.mulf %232, %231 : vector<4x32xf32>
    %234 = math.tanh %233 : vector<4x32xf32>
    %cst_76 = arith.constant 1.000000e+00 : f32
    %235 = vector.broadcast %cst_76 : f32 to vector<4x32xf32>
    %236 = arith.addf %234, %235 : vector<4x32xf32>
    %cst_77 = arith.constant 5.000000e-01 : f32
    %237 = vector.broadcast %cst_77 : f32 to vector<4x32xf32>
    %238 = arith.mulf %237, %236 : vector<4x32xf32>
    %239 = vector.extract_strided_slice %222 {offsets = [0, 64], sizes = [4, 32], strides = [1, 1]} : vector<4x128xf32> to vector<4x32xf32>
    %240 = math.tanh %239 : vector<4x32xf32>
    %241 = vector.extract_strided_slice %222 {offsets = [0, 96], sizes = [4, 32], strides = [1, 1]} : vector<4x128xf32> to vector<4x32xf32>
    %cst_78 = arith.constant 5.000000e-01 : f32
    %242 = vector.broadcast %cst_78 : f32 to vector<4x32xf32>
    %243 = arith.mulf %242, %241 : vector<4x32xf32>
    %244 = math.tanh %243 : vector<4x32xf32>
    %cst_79 = arith.constant 1.000000e+00 : f32
    %245 = vector.broadcast %cst_79 : f32 to vector<4x32xf32>
    %246 = arith.addf %244, %245 : vector<4x32xf32>
    %cst_80 = arith.constant 5.000000e-01 : f32
    %247 = vector.broadcast %cst_80 : f32 to vector<4x32xf32>
    %248 = arith.mulf %247, %246 : vector<4x32xf32>
    %249 = arith.mulf %238, %191 : vector<4x32xf32>
    %250 = arith.mulf %230, %240 : vector<4x32xf32>
    %251 = arith.addf %249, %250 : vector<4x32xf32>
    %252 = math.tanh %251 : vector<4x32xf32>
    %253 = arith.mulf %248, %252 : vector<4x32xf32>
    %c0_81 = arith.constant 0 : index
    %c24 = arith.constant 24 : index
    %254 = vector.load %arg8[%c0_81, %c24] : memref<4x64xf32, #tpu.memory_space<vmem>>, vector<4x8xf32>
    tpu.vector_store %arg8[%c0_81, %c24], %217 {strides = array<i32>} : memref<4x64xf32, #tpu.memory_space<vmem>>, vector<4x8xf32>,
    %c0_82 = arith.constant 0 : index
    %c96 = arith.constant 96 : index
    %255 = vector.load %arg9[%c0_82, %c96] : memref<4x256xf32, #tpu.memory_space<vmem>>, vector<4x32xf32>
    tpu.vector_store %arg9[%c0_82, %c96], %253 {strides = array<i32>} : memref<4x256xf32, #tpu.memory_space<vmem>>, vector<4x32xf32>,
    %256 = vector.broadcast %0 : vector<1x32xf32> to vector<4x32xf32>
    %257 = arith.mulf %253, %256 : vector<4x32xf32>
    %258 = vector.broadcast %1 : vector<1x32xf32> to vector<4x32xf32>
    %259 = arith.mulf %251, %258 : vector<4x32xf32>
    %260 = arith.addf %257, %259 : vector<4x32xf32>
    %cst_83 = arith.constant dense<0.000000e+00> : vector<4xf32>
    %261 = vector.multi_reduction <add>, %260, %cst_83 [1] : vector<4x32xf32> to vector<4xf32>
    %262 = vector.shape_cast %261 : vector<4xf32> to vector<4x1xf32>
    %263 = vector.broadcast %262 : vector<4x1xf32> to vector<4x8xf32>
    %264 = arith.addf %263, %13 : vector<4x8xf32>
    %cst_84 = arith.constant dense<0xFF800000> : vector<4xf32>
    %265 = vector.multi_reduction <maximumf>, %264, %cst_84 [1] : vector<4x8xf32> to vector<4xf32>
    %266 = vector.shape_cast %265 : vector<4xf32> to vector<4x1xf32>
    %267 = vector.broadcast %266 : vector<4x1xf32> to vector<4x8xf32>
    %268 = arith.subf %264, %267 : vector<4x8xf32>
    %269 = math.exp %268 : vector<4x8xf32>
    %cst_85 = arith.constant dense<0.000000e+00> : vector<4xf32>
    %270 = vector.multi_reduction <add>, %269, %cst_85 [1] : vector<4x8xf32> to vector<4xf32>
    %271 = vector.shape_cast %270 : vector<4xf32> to vector<4x1xf32>
    %272 = tpu.reciprocal %271 {approx = true} : vector<4x1xf32> -> vector<4x1xf32>
    %273 = vector.broadcast %272 : vector<4x1xf32> to vector<4x8xf32>
    %274 = arith.mulf %269, %273 : vector<4x8xf32>
    %275 = vector.extract_strided_slice %5 {offsets = [0, 4, 0], sizes = [4, 1, 8], strides = [1, 1, 1]} : vector<4x8x8xf32> to vector<4x1x8xf32>
    %276 = vector.shape_cast %275 : vector<4x1x8xf32> to vector<4x8xf32>
    %277 = arith.mulf %274, %276 : vector<4x8xf32>
    %cst_86 = arith.constant dense<0.000000e+00> : vector<4x128xf32>
    %278 = tpu.matmul %277, %2, %cst_86 {dimension_numbers = #tpu.dot_dimension_numbers<[1], [0], [0], [1], [0, 0, 1, 1], [], []>} : vector<4x8xf32>, vector<8x128xf32>, vector<4x128xf32> -> vector<4x128xf32>
    %cst_87 = arith.constant dense<0.000000e+00> : vector<4x128xf32>
    %279 = tpu.matmul %253, %3, %cst_87 {dimension_numbers = #tpu.dot_dimension_numbers<[1], [0], [0], [1], [0, 0, 1, 1], [], []>} : vector<4x32xf32>, vector<32x128xf32>, vector<4x128xf32> -> vector<4x128xf32>
    %280 = arith.addf %278, %279 : vector<4x128xf32>
    %281 = vector.broadcast %4 : vector<1x128xf32> to vector<4x128xf32>
    %282 = arith.addf %280, %281 : vector<4x128xf32>
    %283 = vector.extract_strided_slice %282 {offsets = [0, 0], sizes = [4, 32], strides = [1, 1]} : vector<4x128xf32> to vector<4x32xf32>
    %cst_88 = arith.constant 5.000000e-01 : f32
    %284 = vector.broadcast %cst_88 : f32 to vector<4x32xf32>
    %285 = arith.mulf %284, %283 : vector<4x32xf32>
    %286 = math.tanh %285 : vector<4x32xf32>
    %cst_89 = arith.constant 1.000000e+00 : f32
    %287 = vector.broadcast %cst_89 : f32 to vector<4x32xf32>
    %288 = arith.addf %286, %287 : vector<4x32xf32>
    %cst_90 = arith.constant 5.000000e-01 : f32
    %289 = vector.broadcast %cst_90 : f32 to vector<4x32xf32>
    %290 = arith.mulf %289, %288 : vector<4x32xf32>
    %291 = vector.extract_strided_slice %282 {offsets = [0, 32], sizes = [4, 32], strides = [1, 1]} : vector<4x128xf32> to vector<4x32xf32>
    %cst_91 = arith.constant 5.000000e-01 : f32
    %292 = vector.broadcast %cst_91 : f32 to vector<4x32xf32>
    %293 = arith.mulf %292, %291 : vector<4x32xf32>
    %294 = math.tanh %293 : vector<4x32xf32>
    %cst_92 = arith.constant 1.000000e+00 : f32
    %295 = vector.broadcast %cst_92 : f32 to vector<4x32xf32>
    %296 = arith.addf %294, %295 : vector<4x32xf32>
    %cst_93 = arith.constant 5.000000e-01 : f32
    %297 = vector.broadcast %cst_93 : f32 to vector<4x32xf32>
    %298 = arith.mulf %297, %296 : vector<4x32xf32>
    %299 = vector.extract_strided_slice %282 {offsets = [0, 64], sizes = [4, 32], strides = [1, 1]} : vector<4x128xf32> to vector<4x32xf32>
    %300 = math.tanh %299 : vector<4x32xf32>
    %301 = vector.extract_strided_slice %282 {offsets = [0, 96], sizes = [4, 32], strides = [1, 1]} : vector<4x128xf32> to vector<4x32xf32>
    %cst_94 = arith.constant 5.000000e-01 : f32
    %302 = vector.broadcast %cst_94 : f32 to vector<4x32xf32>
    %303 = arith.mulf %302, %301 : vector<4x32xf32>
    %304 = math.tanh %303 : vector<4x32xf32>
    %cst_95 = arith.constant 1.000000e+00 : f32
    %305 = vector.broadcast %cst_95 : f32 to vector<4x32xf32>
    %306 = arith.addf %304, %305 : vector<4x32xf32>
    %cst_96 = arith.constant 5.000000e-01 : f32
    %307 = vector.broadcast %cst_96 : f32 to vector<4x32xf32>
    %308 = arith.mulf %307, %306 : vector<4x32xf32>
    %309 = arith.mulf %298, %251 : vector<4x32xf32>
    %310 = arith.mulf %290, %300 : vector<4x32xf32>
    %311 = arith.addf %309, %310 : vector<4x32xf32>
    %312 = math.tanh %311 : vector<4x32xf32>
    %313 = arith.mulf %308, %312 : vector<4x32xf32>
    %c0_97 = arith.constant 0 : index
    %c32_98 = arith.constant 32 : index
    %314 = vector.load %arg8[%c0_97, %c32_98] : memref<4x64xf32, #tpu.memory_space<vmem>>, vector<4x8xf32>
    tpu.vector_store %arg8[%c0_97, %c32_98], %277 {strides = array<i32>} : memref<4x64xf32, #tpu.memory_space<vmem>>, vector<4x8xf32>,
    %c0_99 = arith.constant 0 : index
    %c128 = arith.constant 128 : index
    %315 = vector.load %arg9[%c0_99, %c128] : memref<4x256xf32, #tpu.memory_space<vmem>>, vector<4x32xf32>
    tpu.vector_store %arg9[%c0_99, %c128], %313 {strides = array<i32>} : memref<4x256xf32, #tpu.memory_space<vmem>>, vector<4x32xf32>,
    %316 = vector.broadcast %0 : vector<1x32xf32> to vector<4x32xf32>
    %317 = arith.mulf %313, %316 : vector<4x32xf32>
    %318 = vector.broadcast %1 : vector<1x32xf32> to vector<4x32xf32>
    %319 = arith.mulf %311, %318 : vector<4x32xf32>
    %320 = arith.addf %317, %319 : vector<4x32xf32>
    %cst_100 = arith.constant dense<0.000000e+00> : vector<4xf32>
    %321 = vector.multi_reduction <add>, %320, %cst_100 [1] : vector<4x32xf32> to vector<4xf32>
    %322 = vector.shape_cast %321 : vector<4xf32> to vector<4x1xf32>
    %323 = vector.broadcast %322 : vector<4x1xf32> to vector<4x8xf32>
    %324 = arith.addf %323, %13 : vector<4x8xf32>
    %cst_101 = arith.constant dense<0xFF800000> : vector<4xf32>
    %325 = vector.multi_reduction <maximumf>, %324, %cst_101 [1] : vector<4x8xf32> to vector<4xf32>
    %326 = vector.shape_cast %325 : vector<4xf32> to vector<4x1xf32>
    %327 = vector.broadcast %326 : vector<4x1xf32> to vector<4x8xf32>
    %328 = arith.subf %324, %327 : vector<4x8xf32>
    %329 = math.exp %328 : vector<4x8xf32>
    %cst_102 = arith.constant dense<0.000000e+00> : vector<4xf32>
    %330 = vector.multi_reduction <add>, %329, %cst_102 [1] : vector<4x8xf32> to vector<4xf32>
    %331 = vector.shape_cast %330 : vector<4xf32> to vector<4x1xf32>
    %332 = tpu.reciprocal %331 {approx = true} : vector<4x1xf32> -> vector<4x1xf32>
    %333 = vector.broadcast %332 : vector<4x1xf32> to vector<4x8xf32>
    %334 = arith.mulf %329, %333 : vector<4x8xf32>
    %335 = vector.extract_strided_slice %5 {offsets = [0, 5, 0], sizes = [4, 1, 8], strides = [1, 1, 1]} : vector<4x8x8xf32> to vector<4x1x8xf32>
    %336 = vector.shape_cast %335 : vector<4x1x8xf32> to vector<4x8xf32>
    %337 = arith.mulf %334, %336 : vector<4x8xf32>
    %cst_103 = arith.constant dense<0.000000e+00> : vector<4x128xf32>
    %338 = tpu.matmul %337, %2, %cst_103 {dimension_numbers = #tpu.dot_dimension_numbers<[1], [0], [0], [1], [0, 0, 1, 1], [], []>} : vector<4x8xf32>, vector<8x128xf32>, vector<4x128xf32> -> vector<4x128xf32>
    %cst_104 = arith.constant dense<0.000000e+00> : vector<4x128xf32>
    %339 = tpu.matmul %313, %3, %cst_104 {dimension_numbers = #tpu.dot_dimension_numbers<[1], [0], [0], [1], [0, 0, 1, 1], [], []>} : vector<4x32xf32>, vector<32x128xf32>, vector<4x128xf32> -> vector<4x128xf32>
    %340 = arith.addf %338, %339 : vector<4x128xf32>
    %341 = vector.broadcast %4 : vector<1x128xf32> to vector<4x128xf32>
    %342 = arith.addf %340, %341 : vector<4x128xf32>
    %343 = vector.extract_strided_slice %342 {offsets = [0, 0], sizes = [4, 32], strides = [1, 1]} : vector<4x128xf32> to vector<4x32xf32>
    %cst_105 = arith.constant 5.000000e-01 : f32
    %344 = vector.broadcast %cst_105 : f32 to vector<4x32xf32>
    %345 = arith.mulf %344, %343 : vector<4x32xf32>
    %346 = math.tanh %345 : vector<4x32xf32>
    %cst_106 = arith.constant 1.000000e+00 : f32
    %347 = vector.broadcast %cst_106 : f32 to vector<4x32xf32>
    %348 = arith.addf %346, %347 : vector<4x32xf32>
    %cst_107 = arith.constant 5.000000e-01 : f32
    %349 = vector.broadcast %cst_107 : f32 to vector<4x32xf32>
    %350 = arith.mulf %349, %348 : vector<4x32xf32>
    %351 = vector.extract_strided_slice %342 {offsets = [0, 32], sizes = [4, 32], strides = [1, 1]} : vector<4x128xf32> to vector<4x32xf32>
    %cst_108 = arith.constant 5.000000e-01 : f32
    %352 = vector.broadcast %cst_108 : f32 to vector<4x32xf32>
    %353 = arith.mulf %352, %351 : vector<4x32xf32>
    %354 = math.tanh %353 : vector<4x32xf32>
    %cst_109 = arith.constant 1.000000e+00 : f32
    %355 = vector.broadcast %cst_109 : f32 to vector<4x32xf32>
    %356 = arith.addf %354, %355 : vector<4x32xf32>
    %cst_110 = arith.constant 5.000000e-01 : f32
    %357 = vector.broadcast %cst_110 : f32 to vector<4x32xf32>
    %358 = arith.mulf %357, %356 : vector<4x32xf32>
    %359 = vector.extract_strided_slice %342 {offsets = [0, 64], sizes = [4, 32], strides = [1, 1]} : vector<4x128xf32> to vector<4x32xf32>
    %360 = math.tanh %359 : vector<4x32xf32>
    %361 = vector.extract_strided_slice %342 {offsets = [0, 96], sizes = [4, 32], strides = [1, 1]} : vector<4x128xf32> to vector<4x32xf32>
    %cst_111 = arith.constant 5.000000e-01 : f32
    %362 = vector.broadcast %cst_111 : f32 to vector<4x32xf32>
    %363 = arith.mulf %362, %361 : vector<4x32xf32>
    %364 = math.tanh %363 : vector<4x32xf32>
    %cst_112 = arith.constant 1.000000e+00 : f32
    %365 = vector.broadcast %cst_112 : f32 to vector<4x32xf32>
    %366 = arith.addf %364, %365 : vector<4x32xf32>
    %cst_113 = arith.constant 5.000000e-01 : f32
    %367 = vector.broadcast %cst_113 : f32 to vector<4x32xf32>
    %368 = arith.mulf %367, %366 : vector<4x32xf32>
    %369 = arith.mulf %358, %311 : vector<4x32xf32>
    %370 = arith.mulf %350, %360 : vector<4x32xf32>
    %371 = arith.addf %369, %370 : vector<4x32xf32>
    %372 = math.tanh %371 : vector<4x32xf32>
    %373 = arith.mulf %368, %372 : vector<4x32xf32>
    %c0_114 = arith.constant 0 : index
    %c40 = arith.constant 40 : index
    %374 = vector.load %arg8[%c0_114, %c40] : memref<4x64xf32, #tpu.memory_space<vmem>>, vector<4x8xf32>
    tpu.vector_store %arg8[%c0_114, %c40], %337 {strides = array<i32>} : memref<4x64xf32, #tpu.memory_space<vmem>>, vector<4x8xf32>,
    %c0_115 = arith.constant 0 : index
    %c160 = arith.constant 160 : index
    %375 = vector.load %arg9[%c0_115, %c160] : memref<4x256xf32, #tpu.memory_space<vmem>>, vector<4x32xf32>
    tpu.vector_store %arg9[%c0_115, %c160], %373 {strides = array<i32>} : memref<4x256xf32, #tpu.memory_space<vmem>>, vector<4x32xf32>,
    %376 = vector.broadcast %0 : vector<1x32xf32> to vector<4x32xf32>
    %377 = arith.mulf %373, %376 : vector<4x32xf32>
    %378 = vector.broadcast %1 : vector<1x32xf32> to vector<4x32xf32>
    %379 = arith.mulf %371, %378 : vector<4x32xf32>
    %380 = arith.addf %377, %379 : vector<4x32xf32>
    %cst_116 = arith.constant dense<0.000000e+00> : vector<4xf32>
    %381 = vector.multi_reduction <add>, %380, %cst_116 [1] : vector<4x32xf32> to vector<4xf32>
    %382 = vector.shape_cast %381 : vector<4xf32> to vector<4x1xf32>
    %383 = vector.broadcast %382 : vector<4x1xf32> to vector<4x8xf32>
    %384 = arith.addf %383, %13 : vector<4x8xf32>
    %cst_117 = arith.constant dense<0xFF800000> : vector<4xf32>
    %385 = vector.multi_reduction <maximumf>, %384, %cst_117 [1] : vector<4x8xf32> to vector<4xf32>
    %386 = vector.shape_cast %385 : vector<4xf32> to vector<4x1xf32>
    %387 = vector.broadcast %386 : vector<4x1xf32> to vector<4x8xf32>
    %388 = arith.subf %384, %387 : vector<4x8xf32>
    %389 = math.exp %388 : vector<4x8xf32>
    %cst_118 = arith.constant dense<0.000000e+00> : vector<4xf32>
    %390 = vector.multi_reduction <add>, %389, %cst_118 [1] : vector<4x8xf32> to vector<4xf32>
    %391 = vector.shape_cast %390 : vector<4xf32> to vector<4x1xf32>
    %392 = tpu.reciprocal %391 {approx = true} : vector<4x1xf32> -> vector<4x1xf32>
    %393 = vector.broadcast %392 : vector<4x1xf32> to vector<4x8xf32>
    %394 = arith.mulf %389, %393 : vector<4x8xf32>
    %395 = vector.extract_strided_slice %5 {offsets = [0, 6, 0], sizes = [4, 1, 8], strides = [1, 1, 1]} : vector<4x8x8xf32> to vector<4x1x8xf32>
    %396 = vector.shape_cast %395 : vector<4x1x8xf32> to vector<4x8xf32>
    %397 = arith.mulf %394, %396 : vector<4x8xf32>
    %cst_119 = arith.constant dense<0.000000e+00> : vector<4x128xf32>
    %398 = tpu.matmul %397, %2, %cst_119 {dimension_numbers = #tpu.dot_dimension_numbers<[1], [0], [0], [1], [0, 0, 1, 1], [], []>} : vector<4x8xf32>, vector<8x128xf32>, vector<4x128xf32> -> vector<4x128xf32>
    %cst_120 = arith.constant dense<0.000000e+00> : vector<4x128xf32>
    %399 = tpu.matmul %373, %3, %cst_120 {dimension_numbers = #tpu.dot_dimension_numbers<[1], [0], [0], [1], [0, 0, 1, 1], [], []>} : vector<4x32xf32>, vector<32x128xf32>, vector<4x128xf32> -> vector<4x128xf32>
    %400 = arith.addf %398, %399 : vector<4x128xf32>
    %401 = vector.broadcast %4 : vector<1x128xf32> to vector<4x128xf32>
    %402 = arith.addf %400, %401 : vector<4x128xf32>
    %403 = vector.extract_strided_slice %402 {offsets = [0, 0], sizes = [4, 32], strides = [1, 1]} : vector<4x128xf32> to vector<4x32xf32>
    %cst_121 = arith.constant 5.000000e-01 : f32
    %404 = vector.broadcast %cst_121 : f32 to vector<4x32xf32>
    %405 = arith.mulf %404, %403 : vector<4x32xf32>
    %406 = math.tanh %405 : vector<4x32xf32>
    %cst_122 = arith.constant 1.000000e+00 : f32
    %407 = vector.broadcast %cst_122 : f32 to vector<4x32xf32>
    %408 = arith.addf %406, %407 : vector<4x32xf32>
    %cst_123 = arith.constant 5.000000e-01 : f32
    %409 = vector.broadcast %cst_123 : f32 to vector<4x32xf32>
    %410 = arith.mulf %409, %408 : vector<4x32xf32>
    %411 = vector.extract_strided_slice %402 {offsets = [0, 32], sizes = [4, 32], strides = [1, 1]} : vector<4x128xf32> to vector<4x32xf32>
    %cst_124 = arith.constant 5.000000e-01 : f32
    %412 = vector.broadcast %cst_124 : f32 to vector<4x32xf32>
    %413 = arith.mulf %412, %411 : vector<4x32xf32>
    %414 = math.tanh %413 : vector<4x32xf32>
    %cst_125 = arith.constant 1.000000e+00 : f32
    %415 = vector.broadcast %cst_125 : f32 to vector<4x32xf32>
    %416 = arith.addf %414, %415 : vector<4x32xf32>
    %cst_126 = arith.constant 5.000000e-01 : f32
    %417 = vector.broadcast %cst_126 : f32 to vector<4x32xf32>
    %418 = arith.mulf %417, %416 : vector<4x32xf32>
    %419 = vector.extract_strided_slice %402 {offsets = [0, 64], sizes = [4, 32], strides = [1, 1]} : vector<4x128xf32> to vector<4x32xf32>
    %420 = math.tanh %419 : vector<4x32xf32>
    %421 = vector.extract_strided_slice %402 {offsets = [0, 96], sizes = [4, 32], strides = [1, 1]} : vector<4x128xf32> to vector<4x32xf32>
    %cst_127 = arith.constant 5.000000e-01 : f32
    %422 = vector.broadcast %cst_127 : f32 to vector<4x32xf32>
    %423 = arith.mulf %422, %421 : vector<4x32xf32>
    %424 = math.tanh %423 : vector<4x32xf32>
    %cst_128 = arith.constant 1.000000e+00 : f32
    %425 = vector.broadcast %cst_128 : f32 to vector<4x32xf32>
    %426 = arith.addf %424, %425 : vector<4x32xf32>
    %cst_129 = arith.constant 5.000000e-01 : f32
    %427 = vector.broadcast %cst_129 : f32 to vector<4x32xf32>
    %428 = arith.mulf %427, %426 : vector<4x32xf32>
    %429 = arith.mulf %418, %371 : vector<4x32xf32>
    %430 = arith.mulf %410, %420 : vector<4x32xf32>
    %431 = arith.addf %429, %430 : vector<4x32xf32>
    %432 = math.tanh %431 : vector<4x32xf32>
    %433 = arith.mulf %428, %432 : vector<4x32xf32>
    %c0_130 = arith.constant 0 : index
    %c48 = arith.constant 48 : index
    %434 = vector.load %arg8[%c0_130, %c48] : memref<4x64xf32, #tpu.memory_space<vmem>>, vector<4x8xf32>
    tpu.vector_store %arg8[%c0_130, %c48], %397 {strides = array<i32>} : memref<4x64xf32, #tpu.memory_space<vmem>>, vector<4x8xf32>,
    %c0_131 = arith.constant 0 : index
    %c192 = arith.constant 192 : index
    %435 = vector.load %arg9[%c0_131, %c192] : memref<4x256xf32, #tpu.memory_space<vmem>>, vector<4x32xf32>
    tpu.vector_store %arg9[%c0_131, %c192], %433 {strides = array<i32>} : memref<4x256xf32, #tpu.memory_space<vmem>>, vector<4x32xf32>,
    %436 = vector.broadcast %0 : vector<1x32xf32> to vector<4x32xf32>
    %437 = arith.mulf %433, %436 : vector<4x32xf32>
    %438 = vector.broadcast %1 : vector<1x32xf32> to vector<4x32xf32>
    %439 = arith.mulf %431, %438 : vector<4x32xf32>
    %440 = arith.addf %437, %439 : vector<4x32xf32>
    %cst_132 = arith.constant dense<0.000000e+00> : vector<4xf32>
    %441 = vector.multi_reduction <add>, %440, %cst_132 [1] : vector<4x32xf32> to vector<4xf32>
    %442 = vector.shape_cast %441 : vector<4xf32> to vector<4x1xf32>
    %443 = vector.broadcast %442 : vector<4x1xf32> to vector<4x8xf32>
    %444 = arith.addf %443, %13 : vector<4x8xf32>
    %cst_133 = arith.constant dense<0xFF800000> : vector<4xf32>
    %445 = vector.multi_reduction <maximumf>, %444, %cst_133 [1] : vector<4x8xf32> to vector<4xf32>
    %446 = vector.shape_cast %445 : vector<4xf32> to vector<4x1xf32>
    %447 = vector.broadcast %446 : vector<4x1xf32> to vector<4x8xf32>
    %448 = arith.subf %444, %447 : vector<4x8xf32>
    %449 = math.exp %448 : vector<4x8xf32>
    %cst_134 = arith.constant dense<0.000000e+00> : vector<4xf32>
    %450 = vector.multi_reduction <add>, %449, %cst_134 [1] : vector<4x8xf32> to vector<4xf32>
    %451 = vector.shape_cast %450 : vector<4xf32> to vector<4x1xf32>
    %452 = tpu.reciprocal %451 {approx = true} : vector<4x1xf32> -> vector<4x1xf32>
    %453 = vector.broadcast %452 : vector<4x1xf32> to vector<4x8xf32>
    %454 = arith.mulf %449, %453 : vector<4x8xf32>
    %455 = vector.extract_strided_slice %5 {offsets = [0, 7, 0], sizes = [4, 1, 8], strides = [1, 1, 1]} : vector<4x8x8xf32> to vector<4x1x8xf32>
    %456 = vector.shape_cast %455 : vector<4x1x8xf32> to vector<4x8xf32>
    %457 = arith.mulf %454, %456 : vector<4x8xf32>
    %cst_135 = arith.constant dense<0.000000e+00> : vector<4x128xf32>
    %458 = tpu.matmul %457, %2, %cst_135 {dimension_numbers = #tpu.dot_dimension_numbers<[1], [0], [0], [1], [0, 0, 1, 1], [], []>} : vector<4x8xf32>, vector<8x128xf32>, vector<4x128xf32> -> vector<4x128xf32>
    %cst_136 = arith.constant dense<0.000000e+00> : vector<4x128xf32>
    %459 = tpu.matmul %433, %3, %cst_136 {dimension_numbers = #tpu.dot_dimension_numbers<[1], [0], [0], [1], [0, 0, 1, 1], [], []>} : vector<4x32xf32>, vector<32x128xf32>, vector<4x128xf32> -> vector<4x128xf32>
    %460 = arith.addf %458, %459 : vector<4x128xf32>
    %461 = vector.broadcast %4 : vector<1x128xf32> to vector<4x128xf32>
    %462 = arith.addf %460, %461 : vector<4x128xf32>
    %463 = vector.extract_strided_slice %462 {offsets = [0, 0], sizes = [4, 32], strides = [1, 1]} : vector<4x128xf32> to vector<4x32xf32>
    %cst_137 = arith.constant 5.000000e-01 : f32
    %464 = vector.broadcast %cst_137 : f32 to vector<4x32xf32>
    %465 = arith.mulf %464, %463 : vector<4x32xf32>
    %466 = math.tanh %465 : vector<4x32xf32>
    %cst_138 = arith.constant 1.000000e+00 : f32
    %467 = vector.broadcast %cst_138 : f32 to vector<4x32xf32>
    %468 = arith.addf %466, %467 : vector<4x32xf32>
    %cst_139 = arith.constant 5.000000e-01 : f32
    %469 = vector.broadcast %cst_139 : f32 to vector<4x32xf32>
    %470 = arith.mulf %469, %468 : vector<4x32xf32>
    %471 = vector.extract_strided_slice %462 {offsets = [0, 32], sizes = [4, 32], strides = [1, 1]} : vector<4x128xf32> to vector<4x32xf32>
    %cst_140 = arith.constant 5.000000e-01 : f32
    %472 = vector.broadcast %cst_140 : f32 to vector<4x32xf32>
    %473 = arith.mulf %472, %471 : vector<4x32xf32>
    %474 = math.tanh %473 : vector<4x32xf32>
    %cst_141 = arith.constant 1.000000e+00 : f32
    %475 = vector.broadcast %cst_141 : f32 to vector<4x32xf32>
    %476 = arith.addf %474, %475 : vector<4x32xf32>
    %cst_142 = arith.constant 5.000000e-01 : f32
    %477 = vector.broadcast %cst_142 : f32 to vector<4x32xf32>
    %478 = arith.mulf %477, %476 : vector<4x32xf32>
    %479 = vector.extract_strided_slice %462 {offsets = [0, 64], sizes = [4, 32], strides = [1, 1]} : vector<4x128xf32> to vector<4x32xf32>
    %480 = math.tanh %479 : vector<4x32xf32>
    %481 = vector.extract_strided_slice %462 {offsets = [0, 96], sizes = [4, 32], strides = [1, 1]} : vector<4x128xf32> to vector<4x32xf32>
    %cst_143 = arith.constant 5.000000e-01 : f32
    %482 = vector.broadcast %cst_143 : f32 to vector<4x32xf32>
    %483 = arith.mulf %482, %481 : vector<4x32xf32>
    %484 = math.tanh %483 : vector<4x32xf32>
    %cst_144 = arith.constant 1.000000e+00 : f32
    %485 = vector.broadcast %cst_144 : f32 to vector<4x32xf32>
    %486 = arith.addf %484, %485 : vector<4x32xf32>
    %cst_145 = arith.constant 5.000000e-01 : f32
    %487 = vector.broadcast %cst_145 : f32 to vector<4x32xf32>
    %488 = arith.mulf %487, %486 : vector<4x32xf32>
    %489 = arith.mulf %478, %431 : vector<4x32xf32>
    %490 = arith.mulf %470, %480 : vector<4x32xf32>
    %491 = arith.addf %489, %490 : vector<4x32xf32>
    %492 = math.tanh %491 : vector<4x32xf32>
    %493 = arith.mulf %488, %492 : vector<4x32xf32>
    %c0_146 = arith.constant 0 : index
    %c56 = arith.constant 56 : index
    %494 = vector.load %arg8[%c0_146, %c56] : memref<4x64xf32, #tpu.memory_space<vmem>>, vector<4x8xf32>
    tpu.vector_store %arg8[%c0_146, %c56], %457 {strides = array<i32>} : memref<4x64xf32, #tpu.memory_space<vmem>>, vector<4x8xf32>,
    %c0_147 = arith.constant 0 : index
    %c224 = arith.constant 224 : index
    %495 = vector.load %arg9[%c0_147, %c224] : memref<4x256xf32, #tpu.memory_space<vmem>>, vector<4x32xf32>
    tpu.vector_store %arg9[%c0_147, %c224], %493 {strides = array<i32>} : memref<4x256xf32, #tpu.memory_space<vmem>>, vector<4x32xf32>,
    return
  }
}

</mosaic_0001>

<llo_original>
// kernel: tpu_custom_call.1
$region0: #{tpu_custom_call.1}
  #allocation0 [shape = 'u32[]', space=smem, size = 0x4, offset = 0x4, fixed_abs, tag = 'smem constant byte address 0x4 - core index']
  #allocation1 [shape = 'u32[72,128]{1,0:T(1,128)}', space=vmem, size = 0x9000, scoped, tag = 'internal scratch']
  #allocation2 [shape = 'f32[1]{0:T(128)S(6)}', space=smem, size = 0x200, scoped, tag = 'scoped memory for tpu_custom_call.1']
  %s0 = inlined_call_operand.hbm [shape: f32[4,8,8], index: 0, kind: input, shape index: {}]
  %s1 = inlined_call_operand.vmem [shape: f32[1,32], index: 1, kind: input, shape index: {}]
  %s2 = inlined_call_operand.vmem [shape: f32[1,32], index: 2, kind: input, shape index: {}]
  %s3 = inlined_call_operand.vmem [shape: f32[8,1], index: 3, kind: input, shape index: {}]
  %s4 = inlined_call_operand.<no memory space> [shape: f32[1], index: 4, kind: input, shape index: {}]
  %s5 = inlined_call_operand.vmem [shape: f32[8,128], index: 5, kind: input, shape index: {}]
  %s6 = inlined_call_operand.hbm [shape: f32[32,128], index: 6, kind: input, shape index: {}]
  %s7 = inlined_call_operand.vmem [shape: f32[1,128], index: 7, kind: input, shape index: {}]
  %s8 = inlined_call_operand.hbm [shape: f32[4,64], index: 8, kind: output, shape index: {0}]
  %s9 = inlined_call_operand.hbm [shape: f32[4,256], index: 9, kind: output, shape index: {1}]
  %10 = xla_tuple %s8, %s9
  %s11 = sld [smem:[#allocation0]]
  $region58: #{tpu_custom_call.1} parent=0
    _
  %s13 = ssub.s32 1, %s11
  %s14 = scalar_select 0, %s13, %s11
  %15 = sst [smem:[#allocation2]] %s4
  $region1: #{tpu_custom_call.1} parent=0
    #allocation3 [shape = 'u8[16384]{0}', space=vmem, size = 0x4000, scoped, tag = 'input window, operand 0, single buffered']
    #allocation4 [shape = 's32[1]{0}', space=sflag, size = 0x4, scoped, tag = 'scoped memory for tpu_custom_call.1']
    #allocation5 [shape = 's32[1]{0}', space=sflag, size = 0x4, scoped, tag = 'scoped memory for tpu_custom_call.1']
    #allocation6 [shape = 'u8[16384]{0}', space=vmem, size = 0x4000, scoped, tag = 'input window, operand 6, single buffered']
    #allocation7 [shape = 's32[1]{0}', space=sflag, size = 0x4, scoped, tag = 'scoped memory for tpu_custom_call.1']
    #allocation8 [shape = 'u8[2048]{0}', space=vmem, size = 0x800, scoped, tag = 'output window, operand 0, single buffered']
    #allocation9 [shape = 'u8[4096]{0}', space=vmem, size = 0x1000, scoped, tag = 'output window, operand 1, single buffered']
    #allocation10 [shape = 's32[1]{0}', space=sflag, size = 0x4, scoped, tag = 'scoped memory for tpu_custom_call.1']
    %16 = vsyncpa [#allocation4], 0
    %17 = vsyncpa [#allocation7], 0
    %18 = vsyncpa [#allocation5], 0
    %19 = vsyncpa [#allocation10], 0
    // Predicated region
    $region2: #{tpu_custom_call.1} parent=1 // pred_check
      _
    $region3: #{tpu_custom_call.1} parent=1 // pred_check_branch
      %21 = sbr.rel (0) target = $region5
    $region4: #{tpu_custom_call.1} parent=1 // pred_region
      %23 = vsyncadd [#allocation4], 0
      %s24 = sshll.u32 %s0, 4
      %s25 = int_to_ptr.hbm [resolvable:$true] %s24
      %s26 = sshll.u32 [#allocation3], 4
      %s27 = int_to_ptr.vmem [resolvable:$true] %s26
      %32 = dma.hbm_to_vmem [thread:$0]  %s25, 512, %s27, [#allocation4], 128, 128, 8
    $region5: #{tpu_custom_call.1} parent=1 // pred_fallthru
      _
    // Predicated region
    $region6: #{tpu_custom_call.1} parent=1 // pred_check
      _
    $region7: #{tpu_custom_call.1} parent=1 // pred_check_branch
      %34 = sbr.rel (0) target = $region9
    $region8: #{tpu_custom_call.1} parent=1 // pred_region
      _
    $region9: #{tpu_custom_call.1} parent=1 // pred_fallthru
      _
    // Predicated region
    $region10: #{tpu_custom_call.1} parent=1 // pred_check
      _
    $region11: #{tpu_custom_call.1} parent=1 // pred_check_branch
      %36 = sbr.rel (0) target = $region13
    $region12: #{tpu_custom_call.1} parent=1 // pred_region
      _
    $region13: #{tpu_custom_call.1} parent=1 // pred_fallthru
      _
    // Predicated region
    $region14: #{tpu_custom_call.1} parent=1 // pred_check
      _
    $region15: #{tpu_custom_call.1} parent=1 // pred_check_branch
      %38 = sbr.rel (0) target = $region17
    $region16: #{tpu_custom_call.1} parent=1 // pred_region
      _
    $region17: #{tpu_custom_call.1} parent=1 // pred_fallthru
      _
    // Predicated region
    $region18: #{tpu_custom_call.1} parent=1 // pred_check
      _
    $region19: #{tpu_custom_call.1} parent=1 // pred_check_branch
      %40 = sbr.rel (0) target = $region21
    $region20: #{tpu_custom_call.1} parent=1 // pred_region
      _
    $region21: #{tpu_custom_call.1} parent=1 // pred_fallthru
      _
    // Predicated region
    $region22: #{tpu_custom_call.1} parent=1 // pred_check
      _
    $region23: #{tpu_custom_call.1} parent=1 // pred_check_branch
      %42 = sbr.rel (0) target = $region25
    $region24: #{tpu_custom_call.1} parent=1 // pred_region
      _
    $region25: #{tpu_custom_call.1} parent=1 // pred_fallthru
      _
    // Predicated region
    $region26: #{tpu_custom_call.1} parent=1 // pred_check
      _
    $region27: #{tpu_custom_call.1} parent=1 // pred_check_branch
      %44 = sbr.rel (0) target = $region29
    $region28: #{tpu_custom_call.1} parent=1 // pred_region
      %46 = vsyncadd [#allocation7], 0
      %s47 = sshll.u32 %s6, 4
      %s48 = int_to_ptr.hbm [resolvable:$true] %s47
      %s49 = sshll.u32 [#allocation6], 4
      %s50 = int_to_ptr.vmem [resolvable:$true] %s49
      %55 = dma.hbm_to_vmem [thread:$0]  %s48, 512, %s50, [#allocation7], 128, 128, 8
    $region29: #{tpu_custom_call.1} parent=1 // pred_fallthru
      _
    // Predicated region
    $region30: #{tpu_custom_call.1} parent=1 // pred_check
      _
    $region31: #{tpu_custom_call.1} parent=1 // pred_check_branch
      %57 = sbr.rel (0) target = $region33
    $region32: #{tpu_custom_call.1} parent=1 // pred_region
      _
    $region33: #{tpu_custom_call.1} parent=1 // pred_fallthru
      _
    // Predicated region
    $region34: #{tpu_custom_call.1} parent=1 // pred_check
      _
    $region35: #{tpu_custom_call.1} parent=1 // pred_check_branch
      %59 = sbr.rel (0) target = $region37
    $region36: #{tpu_custom_call.1} parent=1 // pred_region
      %61 = dma.done [#allocation4], 512
    $region37: #{tpu_custom_call.1} parent=1 // pred_fallthru
      _
    // Predicated region
    $region38: #{tpu_custom_call.1} parent=1 // pred_check
      _
    $region39: #{tpu_custom_call.1} parent=1 // pred_check_branch
      %63 = sbr.rel (0) target = $region41
    $region40: #{tpu_custom_call.1} parent=1 // pred_region
      %65 = dma.done [#allocation7], 512
    $region41: #{tpu_custom_call.1} parent=1 // pred_fallthru
      _
    %v66 = vld [vmem:[%s1] sm:$0x1]
    %v67 = vld [vmem:[%s2] sm:$0x1]
    %v68 = vld [vmem:[%s5] sm:$0xff]
    %v69 = vld [vmem:[#allocation6] sm:$0xff]
    %v70 = vld [vmem:[#allocation6 + $0x8] sm:$0xff]
    %v71 = vld [vmem:[#allocation6 + $0x10] sm:$0xff]
    %v72 = vld [vmem:[#allocation6 + $0x18] sm:$0xff]
    %v73 = vld [vmem:[%s7] sm:$0x1]
    %v74 = vld [vmem:[#allocation3] sm:$0xff]
    %v75 = vld [vmem:[#allocation3 + $0x8] sm:$0xff]
    %v76 = vld [vmem:[#allocation3 + $0x10] sm:$0xff]
    %v77 = vld [vmem:[#allocation3 + $0x18] sm:$0xff]
    %v78 = vld [vmem:[%s3] sm:$0xff]
    %80 = vset.pattern.permute.xlu0 0
    %81 = vperm.xlu0 %80, %v78
    %v82 = vpop.permute.xlu0 %81
    %v84 = vmul.f32 %v74, %v82
    %v85 = vmul.f32 %v75, %v82
    %v86 = vmul.f32 %v76, %v82
    %v87 = vmul.f32 %v77, %v82
    %vm88 = vcmask 64512
    %v89 = vsel %vm88, %v84, 0.0
    %v90 = vrot.slane %v89, 4
    %v91 = vadd.f32 %v89, %v90
    %v92 = vrot.slane %v91, 2
    %v93 = vadd.f32 %v91, %v92
    %v94 = vrot.slane %v93, 1
    %v95 = vadd.f32 %v93, %v94
    %v96 = vsel %vm88, %v85, 0.0
    %v97 = vrot.slane %v96, 4
    %v98 = vadd.f32 %v96, %v97
    %v99 = vrot.slane %v98, 2
    %v100 = vadd.f32 %v98, %v99
    %v101 = vrot.slane %v100, 1
    %v102 = vadd.f32 %v100, %v101
    %v103 = vsel %vm88, %v86, 0.0
    %v104 = vrot.slane %v103, 4
    %v105 = vadd.f32 %v103, %v104
    %v106 = vrot.slane %v105, 2
    %v107 = vadd.f32 %v105, %v106
    %v108 = vrot.slane %v107, 1
    %v109 = vadd.f32 %v107, %v108
    %v110 = vsel %vm88, %v87, 0.0
    %v111 = vrot.slane %v110, 4
    %v112 = vadd.f32 %v110, %v111
    %v113 = vrot.slane %v112, 2
    %v114 = vadd.f32 %v112, %v113
    %v115 = vrot.slane %v114, 1
    %v116 = vadd.f32 %v114, %v115
    %s117 = sld [smem:[#allocation2]]
    %v118 = vstv %s117
    %v119 = vadd.f32 %v95, %v118
    %v120 = vadd.f32 %v102, %v118
    %v121 = vadd.f32 %v109, %v118
    %v122 = vadd.f32 %v116, %v118
    %v124 = vperm.slane %v66, 0
    %v126 = vmul.f32 %v124, 0.0
    %v128 = vperm.slane %v67, 0
    %v130 = vmul.f32 %v128, 0.0
    %v131 = vadd.f32 %v126, %v130
    %vm132 = vcmask 261120
    %v133 = vsel %vm132, %v131, 0.0
    %134 = vadd.xlane.f32.xlu0 %v133
    %v135 = vpop.xlane.xlu0 %134
    %v136 = vadd.f32 %v135, %v119
    %v137 = vadd.f32 %v135, %v120
    %v138 = vadd.f32 %v135, %v121
    %v139 = vadd.f32 %v135, %v122
    %vm144 = vcmask 1041409
    %v145 = vsel %vm144, %v137, %v136
    %vm146 = vcmask 1042434
    %v147 = vsel %vm146, %v138, %v145
    %vm148 = vcmask 1043459
    %v149 = vsel %vm148, %v139, %v147
    %vm151 = vcmask 60416
    %v152 = vsel %vm151, %v149, -inf
    %153 = vmax.xlane.f32.xlu0 %v152
    %v154 = vpop.xlane.xlu0 %153
    %v156 = vrot.slane %v154, 1
    %v157 = vrot.slane %v154, 2
    %v158 = vrot.slane %v154, 3
    %v163 = vsub.f32 %v136, %v154
    %v164 = vsub.f32 %v137, %v156
    %v165 = vsub.f32 %v138, %v157
    %v166 = vsub.f32 %v139, %v158
    %v167 = vmul.f32 %v163, 1.442695
    %v168 = vpow.pop %v167
    %v169 = vmul.f32 %v164, 1.442695
    %v170 = vpow.pop %v169
    %v171 = vmul.f32 %v165, 1.442695
    %v172 = vpow.pop %v171
    %v173 = vmul.f32 %v166, 1.442695
    %v174 = vpow.pop %v173
    %v179 = vrot.slane %v170, 7
    %v180 = vsel %vm144, %v179, %v168
    %v181 = vrot.slane %v172, 6
    %v182 = vsel %vm146, %v181, %v180
    %v183 = vrot.slane %v174, 5
    %v184 = vsel %vm148, %v183, %v182
    %v186 = vsel %vm151, %v184, 0.0
    %187 = vadd.xlane.f32.xlu0 %v186
    %v188 = vpop.xlane.xlu0 %187
    %v189 = vrcp.pop %v188
    %v191 = vrot.slane %v189, 1
    %v192 = vrot.slane %v189, 2
    %v193 = vrot.slane %v189, 3
    %v198 = vmul.f32 %v168, %v189
    %v199 = vmul.f32 %v170, %v191
    %v200 = vmul.f32 %v172, %v192
    %v201 = vmul.f32 %v174, %v193
    %v202 = vmul.f32 %v198, %v74
    %v203 = vmul.f32 %v199, %v75
    %v204 = vmul.f32 %v200, %v76
    %v205 = vmul.f32 %v201, %v77
    %v207 = vsel %vm132, 0.0, 0
    %209 = vmatpush.msra.mxu0 0.0
    %210 = vmatpush.msra.mxu0 0.0
    %211 = vmatpush.msra.mxu0 0.0
    %212 = vmatpush.msra.mxu0 0.0
    %213 = vmatpush.msra.mxu0 0.0
    %214 = vmatpush.msra.mxu0 0.0
    %215 = vmatpush.msra.mxu0 0.0
    %216 = vmatpush.msra.mxu0 0.0
    %217 = vmatpush.msra.mxu0 0.0
    %218 = vmatpush.msra.mxu0 0.0
    %219 = vmatpush.msra.mxu0 0.0
    %220 = vmatpush.msra.mxu0 0.0
    %221 = vmatpush.msra.mxu0 %v72
    %222 = vmatpush.msra.mxu0 %v71
    %223 = vmatpush.msra.mxu0 %v70
    %224 = vmatpush.msra.mxu0 %v69
    %225 = vmatmul.f32.gmra.mxu0 %v207
    %v226 = vpop.f32.mrf.mxu0
    %v227 = vadd.f32 0.0, %v226
    %228 = vdwg.mxu0
    %v233 = vrot.slane %v203, 7
    %v234 = vsel %vm144, %v233, %v202
    %v235 = vrot.slane %v204, 6
    %v236 = vsel %vm146, %v235, %v234
    %v237 = vrot.slane %v205, 5
    %v238 = vsel %vm148, %v237, %v236
    %v239 = vsel %vm88, %v238, 0
    %241 = vmatpush.msra.mxu0 0.0
    %242 = vmatpush.msra.mxu0 0.0
    %243 = vmatpush.msra.mxu0 0.0
    %244 = vmatpush.msra.mxu0 0.0
    %245 = vmatpush.msra.mxu0 0.0
    %246 = vmatpush.msra.mxu0 0.0
    %247 = vmatpush.msra.mxu0 0.0
    %248 = vmatpush.msra.mxu0 0.0
    %249 = vmatpush.msra.mxu0 0.0
    %250 = vmatpush.msra.mxu0 0.0
    %251 = vmatpush.msra.mxu0 0.0
    %252 = vmatpush.msra.mxu0 0.0
    %253 = vmatpush.msra.mxu0 0.0
    %254 = vmatpush.msra.mxu0 0.0
    %255 = vmatpush.msra.mxu0 0.0
    %256 = vmatpush.msra.mxu0 %v68
    %257 = vmatmul.f32.gmra.mxu0 %v239
    %v258 = vpop.f32.mrf.mxu0
    %v259 = vadd.f32 %v227, %v258
    %260 = vdwg.mxu0
    %v262 = vperm.slane %v73, 0
    %v264 = vadd.f32 %v259, %v262
    %v265 = vmul.f32 %v264, 0.5
    %v266 = vtanh.pop %v265
    %v267 = vadd.f32 %v266, 1.0
    %v268 = vmul.f32 %v267, 0.5
    %v269 = vtanh.pop %v264
    %v270 = vmul.f32 %v268, 0.0
    %272 = vrot.lane.b32.xlu0 %v269, 64
    %v273 = vpop.permute.xlu0 %272
    %v275 = vmul.f32 %v268, %v273
    %277 = vrot.lane.b32.xlu0 %v275, 32
    %v278 = vpop.permute.xlu0 %277
    %v280 = vadd.f32 %v270, %v278
    %v281 = vtanh.pop %v280
    %283 = vrot.lane.b32.xlu0 %v281, 64
    %v284 = vpop.permute.xlu0 %283
    %v286 = vmul.f32 %v268, %v284
    %288 = vst.msk [vmem:[#allocation8] sm:$0xf] %vm151, %v238
    %290 = vrot.lane.b32.xlu0 %v286, 32
    %v291 = vpop.permute.xlu0 %290
    %vm293 = vcmask 257024
    %294 = vst.msk [vmem:[#allocation9] sm:$0xf] %vm293, %v291
    %295 = vrot.lane.b32.xlu0 %v124, 96
    %v296 = vpop.permute.xlu0 %295
    %v298 = vmul.f32 %v286, %v296
    %299 = vrot.lane.b32.xlu0 %v128, 32
    %v300 = vpop.permute.xlu0 %299
    %v302 = vmul.f32 %v280, %v300
    %304 = vrot.lane.b32.xlu0 %v302, 64
    %v305 = vpop.permute.xlu0 %304
    %v307 = vadd.f32 %v298, %v305
    %309 = vrot.lane.b32.xlu0 %v307, 32
    %v310 = vpop.permute.xlu0 %309
    %v312 = vsel %vm293, %v310, 0.0
    %313 = vadd.xlane.f32.xlu0 %v312
    %v314 = vpop.xlane.xlu0 %313
    %v319 = vsel %vm144, %v120, %v119
    %v320 = vsel %vm146, %v121, %v319
    %v321 = vsel %vm148, %v122, %v320
    %v323 = vadd.f32 %v314, %v321
    %v324 = vsel %vm151, %v323, -inf
    %325 = vmax.xlane.f32.xlu0 %v324
    %v326 = vpop.xlane.xlu0 %325
    %v327 = vsub.f32 %v323, %v326
    %v328 = vmul.f32 %v327, 1.442695
    %v329 = vpow.pop %v328
    %v330 = vsel %vm151, %v329, 0.0
    %331 = vadd.xlane.f32.xlu0 %v330
    %v332 = vpop.xlane.xlu0 %331
    %v333 = vrcp.pop %v332
    %v334 = vmul.f32 %v329, %v333
    %v339 = vrot.slane %v74, 1
    %v340 = vsel %vm144, %v75, %v339
    %v341 = vrot.slane %v76, 7
    %v342 = vsel %vm146, %v341, %v340
    %v343 = vrot.slane %v77, 6
    %v344 = vsel %vm148, %v343, %v342
    %v346 = vmul.f32 %v334, %v344
    %v347 = vsel %vm132, %v291, 0
    %349 = vmatpush.msra.mxu0 0.0
    %350 = vmatpush.msra.mxu0 0.0
    %351 = vmatpush.msra.mxu0 0.0
    %352 = vmatpush.msra.mxu0 0.0
    %353 = vmatpush.msra.mxu0 0.0
    %354 = vmatpush.msra.mxu0 0.0
    %355 = vmatpush.msra.mxu0 0.0
    %356 = vmatpush.msra.mxu0 0.0
    %357 = vmatpush.msra.mxu0 0.0
    %358 = vmatpush.msra.mxu0 0.0
    %359 = vmatpush.msra.mxu0 0.0
    %360 = vmatpush.msra.mxu0 0.0
    %361 = vmatpush.msra.mxu0 %v72
    %362 = vmatpush.msra.mxu0 %v71
    %363 = vmatpush.msra.mxu0 %v70
    %364 = vmatpush.msra.mxu0 %v69
    %365 = vmatmul.f32.gmra.mxu0 %v347
    %v366 = vpop.f32.mrf.mxu0
    %v367 = vadd.f32 0.0, %v366
    %368 = vdwg.mxu0
    %v370 = vsel %vm88, %v346, 0
    %372 = vmatpush.msra.mxu0 0.0
    %373 = vmatpush.msra.mxu0 0.0
    %374 = vmatpush.msra.mxu0 0.0
    %375 = vmatpush.msra.mxu0 0.0
    %376 = vmatpush.msra.mxu0 0.0
    %377 = vmatpush.msra.mxu0 0.0
    %378 = vmatpush.msra.mxu0 0.0
    %379 = vmatpush.msra.mxu0 0.0
    %380 = vmatpush.msra.mxu0 0.0
    %381 = vmatpush.msra.mxu0 0.0
    %382 = vmatpush.msra.mxu0 0.0
    %383 = vmatpush.msra.mxu0 0.0
    %384 = vmatpush.msra.mxu0 0.0
    %385 = vmatpush.msra.mxu0 0.0
    %386 = vmatpush.msra.mxu0 0.0
    %387 = vmatpush.msra.mxu0 %v68
    %388 = vmatmul.f32.gmra.mxu0 %v370
    %v389 = vpop.f32.mrf.mxu0
    %v390 = vadd.f32 %v367, %v389
    %391 = vdwg.mxu0
    %v392 = vadd.f32 %v390, %v262
    %v393 = vmul.f32 %v392, 0.5
    %v394 = vtanh.pop %v393
    %v395 = vadd.f32 %v394, 1.0
    %v396 = vmul.f32 %v395, 0.5
    %v397 = vtanh.pop %v392
    %v398 = vmul.f32 %v396, %v280
    %400 = vrot.lane.b32.xlu0 %v397, 64
    %v401 = vpop.permute.xlu0 %400
    %v403 = vmul.f32 %v396, %v401
    %405 = vrot.lane.b32.xlu0 %v403, 32
    %v406 = vpop.permute.xlu0 %405
    %v408 = vadd.f32 %v398, %v406
    %v409 = vtanh.pop %v408
    %411 = vrot.lane.b32.xlu0 %v409, 64
    %v412 = vpop.permute.xlu0 %411
    %v414 = vmul.f32 %v396, %v412
    %415 = vrot.lane.b32.xlu0 %v346, 8
    %v416 = vpop.permute.xlu0 %415
    %vm418 = vcmask 126016
    %419 = vst.msk [vmem:[#allocation8] sm:$0xf] %vm418, %v416
    %421 = vrot.lane.b32.xlu0 %v414, 64
    %v422 = vpop.permute.xlu0 %421
    %vm424 = vcmask 519424
    %425 = vst.msk [vmem:[#allocation9] sm:$0xf] %vm424, %v422
    %v426 = vmul.f32 %v414, %v296
    %v427 = vmul.f32 %v408, %v300
    %429 = vrot.lane.b32.xlu0 %v427, 64
    %v430 = vpop.permute.xlu0 %429
    %v432 = vadd.f32 %v426, %v430
    %434 = vrot.lane.b32.xlu0 %v432, 32
    %v435 = vpop.permute.xlu0 %434
    %v437 = vsel %vm293, %v435, 0.0
    %438 = vadd.xlane.f32.xlu0 %v437
    %v439 = vpop.xlane.xlu0 %438
    %v440 = vadd.f32 %v439, %v321
    %v441 = vsel %vm151, %v440, -inf
    %442 = vmax.xlane.f32.xlu0 %v441
    %v443 = vpop.xlane.xlu0 %442
    %v444 = vsub.f32 %v440, %v443
    %v445 = vmul.f32 %v444, 1.442695
    %v446 = vpow.pop %v445
    %v447 = vsel %vm151, %v446, 0.0
    %448 = vadd.xlane.f32.xlu0 %v447
    %v449 = vpop.xlane.xlu0 %448
    %v450 = vrcp.pop %v449
    %v451 = vmul.f32 %v446, %v450
    %v452 = vrot.slane %v74, 2
    %v453 = vrot.slane %v75, 1
    %v454 = vsel %vm144, %v453, %v452
    %v455 = vsel %vm146, %v76, %v454
    %v456 = vrot.slane %v77, 7
    %v457 = vsel %vm148, %v456, %v455
    %v459 = vmul.f32 %v451, %v457
    %460 = vrot.lane.b32.xlu0 %v414, 32
    %v461 = vpop.permute.xlu0 %460
    %v462 = vsel %vm132, %v461, 0
    %464 = vmatpush.msra.mxu0 0.0
    %465 = vmatpush.msra.mxu0 0.0
    %466 = vmatpush.msra.mxu0 0.0
    %467 = vmatpush.msra.mxu0 0.0
    %468 = vmatpush.msra.mxu0 0.0
    %469 = vmatpush.msra.mxu0 0.0
    %470 = vmatpush.msra.mxu0 0.0
    %471 = vmatpush.msra.mxu0 0.0
    %472 = vmatpush.msra.mxu0 0.0
    %473 = vmatpush.msra.mxu0 0.0
    %474 = vmatpush.msra.mxu0 0.0
    %475 = vmatpush.msra.mxu0 0.0
    %476 = vmatpush.msra.mxu0 %v72
    %477 = vmatpush.msra.mxu0 %v71
    %478 = vmatpush.msra.mxu0 %v70
    %479 = vmatpush.msra.mxu0 %v69
    %480 = vmatmul.f32.gmra.mxu0 %v462
    %v481 = vpop.f32.mrf.mxu0
    %v482 = vadd.f32 0.0, %v481
    %483 = vdwg.mxu0
    %v485 = vsel %vm88, %v459, 0
    %487 = vmatpush.msra.mxu0 0.0
    %488 = vmatpush.msra.mxu0 0.0
    %489 = vmatpush.msra.mxu0 0.0
    %490 = vmatpush.msra.mxu0 0.0
    %491 = vmatpush.msra.mxu0 0.0
    %492 = vmatpush.msra.mxu0 0.0
    %493 = vmatpush.msra.mxu0 0.0
    %494 = vmatpush.msra.mxu0 0.0
    %495 = vmatpush.msra.mxu0 0.0
    %496 = vmatpush.msra.mxu0 0.0
    %497 = vmatpush.msra.mxu0 0.0
    %498 = vmatpush.msra.mxu0 0.0
    %499 = vmatpush.msra.mxu0 0.0
    %500 = vmatpush.msra.mxu0 0.0
    %501 = vmatpush.msra.mxu0 0.0
    %502 = vmatpush.msra.mxu0 %v68
    %503 = vmatmul.f32.gmra.mxu0 %v485
    %v504 = vpop.f32.mrf.mxu0
    %v505 = vadd.f32 %v482, %v504
    %506 = vdwg.mxu0
    %v507 = vadd.f32 %v505, %v262
    %v508 = vmul.f32 %v507, 0.5
    %v509 = vtanh.pop %v508
    %v510 = vadd.f32 %v509, 1.0
    %v511 = vmul.f32 %v510, 0.5
    %v512 = vtanh.pop %v507
    %v513 = vmul.f32 %v511, %v408
    %515 = vrot.lane.b32.xlu0 %v512, 64
    %v516 = vpop.permute.xlu0 %515
    %v518 = vmul.f32 %v511, %v516
    %520 = vrot.lane.b32.xlu0 %v518, 32
    %v521 = vpop.permute.xlu0 %520
    %v523 = vadd.f32 %v513, %v521
    %v524 = vtanh.pop %v523
    %526 = vrot.lane.b32.xlu0 %v524, 64
    %v527 = vpop.permute.xlu0 %526
    %v529 = vmul.f32 %v511, %v527
    %530 = vrot.lane.b32.xlu0 %v459, 16
    %v531 = vpop.permute.xlu0 %530
    %vm533 = vcmask 191616
    %534 = vst.msk [vmem:[#allocation8] sm:$0xf] %vm533, %v531
    %536 = vrot.lane.b32.xlu0 %v529, 96
    %v537 = vpop.permute.xlu0 %536
    %vm539 = vcmask 781824
    %540 = vst.msk [vmem:[#allocation9] sm:$0xf] %vm539, %v537
    %v541 = vmul.f32 %v529, %v296
    %v542 = vmul.f32 %v523, %v300
    %544 = vrot.lane.b32.xlu0 %v542, 64
    %v545 = vpop.permute.xlu0 %544
    %v547 = vadd.f32 %v541, %v545
    %549 = vrot.lane.b32.xlu0 %v547, 32
    %v550 = vpop.permute.xlu0 %549
    %v552 = vsel %vm293, %v550, 0.0
    %553 = vadd.xlane.f32.xlu0 %v552
    %v554 = vpop.xlane.xlu0 %553
    %v555 = vadd.f32 %v554, %v321
    %v556 = vsel %vm151, %v555, -inf
    %557 = vmax.xlane.f32.xlu0 %v556
    %v558 = vpop.xlane.xlu0 %557
    %v559 = vsub.f32 %v555, %v558
    %v560 = vmul.f32 %v559, 1.442695
    %v561 = vpow.pop %v560
    %v562 = vsel %vm151, %v561, 0.0
    %563 = vadd.xlane.f32.xlu0 %v562
    %v564 = vpop.xlane.xlu0 %563
    %v565 = vrcp.pop %v564
    %v566 = vmul.f32 %v561, %v565
    %v567 = vrot.slane %v74, 3
    %v568 = vrot.slane %v75, 2
    %v569 = vsel %vm144, %v568, %v567
    %v570 = vrot.slane %v76, 1
    %v571 = vsel %vm146, %v570, %v569
    %v572 = vsel %vm148, %v77, %v571
    %v574 = vmul.f32 %v566, %v572
    %575 = vrot.lane.b32.xlu0 %v529, 32
    %v576 = vpop.permute.xlu0 %575
    %v577 = vsel %vm132, %v576, 0
    %579 = vmatpush.msra.mxu0 0.0
    %580 = vmatpush.msra.mxu0 0.0
    %581 = vmatpush.msra.mxu0 0.0
    %582 = vmatpush.msra.mxu0 0.0
    %583 = vmatpush.msra.mxu0 0.0
    %584 = vmatpush.msra.mxu0 0.0
    %585 = vmatpush.msra.mxu0 0.0
    %586 = vmatpush.msra.mxu0 0.0
    %587 = vmatpush.msra.mxu0 0.0
    %588 = vmatpush.msra.mxu0 0.0
    %589 = vmatpush.msra.mxu0 0.0
    %590 = vmatpush.msra.mxu0 0.0
    %591 = vmatpush.msra.mxu0 %v72
    %592 = vmatpush.msra.mxu0 %v71
    %593 = vmatpush.msra.mxu0 %v70
    %594 = vmatpush.msra.mxu0 %v69
    %595 = vmatmul.f32.gmra.mxu0 %v577
    %v596 = vpop.f32.mrf.mxu0
    %v597 = vadd.f32 0.0, %v596
    %598 = vdwg.mxu0
    %v600 = vsel %vm88, %v574, 0
    %602 = vmatpush.msra.mxu0 0.0
    %603 = vmatpush.msra.mxu0 0.0
    %604 = vmatpush.msra.mxu0 0.0
    %605 = vmatpush.msra.mxu0 0.0
    %606 = vmatpush.msra.mxu0 0.0
    %607 = vmatpush.msra.mxu0 0.0
    %608 = vmatpush.msra.mxu0 0.0
    %609 = vmatpush.msra.mxu0 0.0
    %610 = vmatpush.msra.mxu0 0.0
    %611 = vmatpush.msra.mxu0 0.0
    %612 = vmatpush.msra.mxu0 0.0
    %613 = vmatpush.msra.mxu0 0.0
    %614 = vmatpush.msra.mxu0 0.0
    %615 = vmatpush.msra.mxu0 0.0
    %616 = vmatpush.msra.mxu0 0.0
    %617 = vmatpush.msra.mxu0 %v68
    %618 = vmatmul.f32.gmra.mxu0 %v600
    %v619 = vpop.f32.mrf.mxu0
    %v620 = vadd.f32 %v597, %v619
    %621 = vdwg.mxu0
    %v622 = vadd.f32 %v620, %v262
    %v623 = vmul.f32 %v622, 0.5
    %v624 = vtanh.pop %v623
    %v625 = vadd.f32 %v624, 1.0
    %v626 = vmul.f32 %v625, 0.5
    %v627 = vtanh.pop %v622
    %v628 = vmul.f32 %v626, %v523
    %630 = vrot.lane.b32.xlu0 %v627, 64
    %v631 = vpop.permute.xlu0 %630
    %v633 = vmul.f32 %v626, %v631
    %635 = vrot.lane.b32.xlu0 %v633, 32
    %v636 = vpop.permute.xlu0 %635
    %v638 = vadd.f32 %v628, %v636
    %v639 = vtanh.pop %v638
    %641 = vrot.lane.b32.xlu0 %v639, 64
    %v642 = vpop.permute.xlu0 %641
    %v644 = vmul.f32 %v626, %v642
    %645 = vrot.lane.b32.xlu0 %v574, 24
    %v646 = vpop.permute.xlu0 %645
    %vm648 = vcmask 257216
    %649 = vst.msk [vmem:[#allocation8] sm:$0xf] %vm648, %v646
    %vm650 = vcmask 1044224
    %651 = vst.msk [vmem:[#allocation9] sm:$0xf] %vm650, %v644
    %v652 = vmul.f32 %v644, %v296
    %v653 = vmul.f32 %v638, %v300
    %655 = vrot.lane.b32.xlu0 %v653, 64
    %v656 = vpop.permute.xlu0 %655
    %v658 = vadd.f32 %v652, %v656
    %660 = vrot.lane.b32.xlu0 %v658, 32
    %v661 = vpop.permute.xlu0 %660
    %v663 = vsel %vm293, %v661, 0.0
    %664 = vadd.xlane.f32.xlu0 %v663
    %v665 = vpop.xlane.xlu0 %664
    %v666 = vadd.f32 %v665, %v321
    %v667 = vsel %vm151, %v666, -inf
    %668 = vmax.xlane.f32.xlu0 %v667
    %v669 = vpop.xlane.xlu0 %668
    %v670 = vsub.f32 %v666, %v669
    %v671 = vmul.f32 %v670, 1.442695
    %v672 = vpow.pop %v671
    %v673 = vsel %vm151, %v672, 0.0
    %674 = vadd.xlane.f32.xlu0 %v673
    %v675 = vpop.xlane.xlu0 %674
    %v676 = vrcp.pop %v675
    %v677 = vmul.f32 %v672, %v676
    %v678 = vrot.slane %v74, 4
    %v679 = vrot.slane %v75, 3
    %v680 = vsel %vm144, %v679, %v678
    %v681 = vrot.slane %v76, 2
    %v682 = vsel %vm146, %v681, %v680
    %v683 = vrot.slane %v77, 1
    %v684 = vsel %vm148, %v683, %v682
    %v686 = vmul.f32 %v677, %v684
    %688 = vrot.lane.b32.xlu0 %v644, 32
    %v689 = vpop.permute.xlu0 %688
    %v690 = vsel %vm132, %v689, 0
    %692 = vmatpush.msra.mxu0 0.0
    %693 = vmatpush.msra.mxu0 0.0
    %694 = vmatpush.msra.mxu0 0.0
    %695 = vmatpush.msra.mxu0 0.0
    %696 = vmatpush.msra.mxu0 0.0
    %697 = vmatpush.msra.mxu0 0.0
    %698 = vmatpush.msra.mxu0 0.0
    %699 = vmatpush.msra.mxu0 0.0
    %700 = vmatpush.msra.mxu0 0.0
    %701 = vmatpush.msra.mxu0 0.0
    %702 = vmatpush.msra.mxu0 0.0
    %703 = vmatpush.msra.mxu0 0.0
    %704 = vmatpush.msra.mxu0 %v72
    %705 = vmatpush.msra.mxu0 %v71
    %706 = vmatpush.msra.mxu0 %v70
    %707 = vmatpush.msra.mxu0 %v69
    %708 = vmatmul.f32.gmra.mxu0 %v690
    %v709 = vpop.f32.mrf.mxu0
    %v710 = vadd.f32 0.0, %v709
    %711 = vdwg.mxu0
    %v713 = vsel %vm88, %v686, 0
    %715 = vmatpush.msra.mxu0 0.0
    %716 = vmatpush.msra.mxu0 0.0
    %717 = vmatpush.msra.mxu0 0.0
    %718 = vmatpush.msra.mxu0 0.0
    %719 = vmatpush.msra.mxu0 0.0
    %720 = vmatpush.msra.mxu0 0.0
    %721 = vmatpush.msra.mxu0 0.0
    %722 = vmatpush.msra.mxu0 0.0
    %723 = vmatpush.msra.mxu0 0.0
    %724 = vmatpush.msra.mxu0 0.0
    %725 = vmatpush.msra.mxu0 0.0
    %726 = vmatpush.msra.mxu0 0.0
    %727 = vmatpush.msra.mxu0 0.0
    %728 = vmatpush.msra.mxu0 0.0
    %729 = vmatpush.msra.mxu0 0.0
    %730 = vmatpush.msra.mxu0 %v68
    %731 = vmatmul.f32.gmra.mxu0 %v713
    %v732 = vpop.f32.mrf.mxu0
    %v733 = vadd.f32 %v710, %v732
    %734 = vdwg.mxu0
    %v735 = vadd.f32 %v733, %v262
    %v736 = vmul.f32 %v735, 0.5
    %v737 = vtanh.pop %v736
    %v738 = vadd.f32 %v737, 1.0
    %v739 = vmul.f32 %v738, 0.5
    %v740 = vtanh.pop %v735
    %v741 = vmul.f32 %v739, %v638
    %743 = vrot.lane.b32.xlu0 %v740, 64
    %v744 = vpop.permute.xlu0 %743
    %v746 = vmul.f32 %v739, %v744
    %748 = vrot.lane.b32.xlu0 %v746, 32
    %v749 = vpop.permute.xlu0 %748
    %v751 = vadd.f32 %v741, %v749
    %v752 = vtanh.pop %v751
    %754 = vrot.lane.b32.xlu0 %v752, 64
    %v755 = vpop.permute.xlu0 %754
    %v757 = vmul.f32 %v739, %v755
    %758 = vrot.lane.b32.xlu0 %v686, 32
    %v759 = vpop.permute.xlu0 %758
    %vm761 = vcmask 322816
    %762 = vst.msk [vmem:[#allocation8] sm:$0xf] %vm761, %v759
    %764 = vrot.lane.b32.xlu0 %v757, 32
    %v765 = vpop.permute.xlu0 %764
    %767 = vst.msk [vmem:[#allocation9 + $0x4] sm:$0xf] %vm293, %v765
    %v768 = vmul.f32 %v757, %v296
    %v769 = vmul.f32 %v751, %v300
    %771 = vrot.lane.b32.xlu0 %v769, 64
    %v772 = vpop.permute.xlu0 %771
    %v774 = vadd.f32 %v768, %v772
    %776 = vrot.lane.b32.xlu0 %v774, 32
    %v777 = vpop.permute.xlu0 %776
    %v779 = vsel %vm293, %v777, 0.0
    %780 = vadd.xlane.f32.xlu0 %v779
    %v781 = vpop.xlane.xlu0 %780
    %v782 = vadd.f32 %v781, %v321
    %v783 = vsel %vm151, %v782, -inf
    %784 = vmax.xlane.f32.xlu0 %v783
    %v785 = vpop.xlane.xlu0 %784
    %v786 = vsub.f32 %v782, %v785
    %v787 = vmul.f32 %v786, 1.442695
    %v788 = vpow.pop %v787
    %v789 = vsel %vm151, %v788, 0.0
    %790 = vadd.xlane.f32.xlu0 %v789
    %v791 = vpop.xlane.xlu0 %790
    %v792 = vrcp.pop %v791
    %v793 = vmul.f32 %v788, %v792
    %v794 = vrot.slane %v74, 5
    %v795 = vrot.slane %v75, 4
    %v796 = vsel %vm144, %v795, %v794
    %v797 = vrot.slane %v76, 3
    %v798 = vsel %vm146, %v797, %v796
    %v799 = vrot.slane %v77, 2
    %v800 = vsel %vm148, %v799, %v798
    %v802 = vmul.f32 %v793, %v800
    %v803 = vsel %vm132, %v765, 0
    %805 = vmatpush.msra.mxu0 0.0
    %806 = vmatpush.msra.mxu0 0.0
    %807 = vmatpush.msra.mxu0 0.0
    %808 = vmatpush.msra.mxu0 0.0
    %809 = vmatpush.msra.mxu0 0.0
    %810 = vmatpush.msra.mxu0 0.0
    %811 = vmatpush.msra.mxu0 0.0
    %812 = vmatpush.msra.mxu0 0.0
    %813 = vmatpush.msra.mxu0 0.0
    %814 = vmatpush.msra.mxu0 0.0
    %815 = vmatpush.msra.mxu0 0.0
    %816 = vmatpush.msra.mxu0 0.0
    %817 = vmatpush.msra.mxu0 %v72
    %818 = vmatpush.msra.mxu0 %v71
    %819 = vmatpush.msra.mxu0 %v70
    %820 = vmatpush.msra.mxu0 %v69
    %821 = vmatmul.f32.gmra.mxu0 %v803
    %v822 = vpop.f32.mrf.mxu0
    %v823 = vadd.f32 0.0, %v822
    %824 = vdwg.mxu0
    %v826 = vsel %vm88, %v802, 0
    %828 = vmatpush.msra.mxu0 0.0
    %829 = vmatpush.msra.mxu0 0.0
    %830 = vmatpush.msra.mxu0 0.0
    %831 = vmatpush.msra.mxu0 0.0
    %832 = vmatpush.msra.mxu0 0.0
    %833 = vmatpush.msra.mxu0 0.0
    %834 = vmatpush.msra.mxu0 0.0
    %835 = vmatpush.msra.mxu0 0.0
    %836 = vmatpush.msra.mxu0 0.0
    %837 = vmatpush.msra.mxu0 0.0
    %838 = vmatpush.msra.mxu0 0.0
    %839 = vmatpush.msra.mxu0 0.0
    %840 = vmatpush.msra.mxu0 0.0
    %841 = vmatpush.msra.mxu0 0.0
    %842 = vmatpush.msra.mxu0 0.0
    %843 = vmatpush.msra.mxu0 %v68
    %844 = vmatmul.f32.gmra.mxu0 %v826
    %v845 = vpop.f32.mrf.mxu0
    %v846 = vadd.f32 %v823, %v845
    %847 = vdwg.mxu0
    %v848 = vadd.f32 %v846, %v262
    %v849 = vmul.f32 %v848, 0.5
    %v850 = vtanh.pop %v849
    %v851 = vadd.f32 %v850, 1.0
    %v852 = vmul.f32 %v851, 0.5
    %v853 = vtanh.pop %v848
    %v854 = vmul.f32 %v852, %v751
    %856 = vrot.lane.b32.xlu0 %v853, 64
    %v857 = vpop.permute.xlu0 %856
    %v859 = vmul.f32 %v852, %v857
    %861 = vrot.lane.b32.xlu0 %v859, 32
    %v862 = vpop.permute.xlu0 %861
    %v864 = vadd.f32 %v854, %v862
    %v865 = vtanh.pop %v864
    %867 = vrot.lane.b32.xlu0 %v865, 64
    %v868 = vpop.permute.xlu0 %867
    %v870 = vmul.f32 %v852, %v868
    %871 = vrot.lane.b32.xlu0 %v802, 40
    %v872 = vpop.permute.xlu0 %871
    %vm874 = vcmask 388416
    %875 = vst.msk [vmem:[#allocation8] sm:$0xf] %vm874, %v872
    %877 = vrot.lane.b32.xlu0 %v870, 64
    %v878 = vpop.permute.xlu0 %877
    %880 = vst.msk [vmem:[#allocation9 + $0x4] sm:$0xf] %vm424, %v878
    %v881 = vmul.f32 %v870, %v296
    %v882 = vmul.f32 %v864, %v300
    %884 = vrot.lane.b32.xlu0 %v882, 64
    %v885 = vpop.permute.xlu0 %884
    %v887 = vadd.f32 %v881, %v885
    %889 = vrot.lane.b32.xlu0 %v887, 32
    %v890 = vpop.permute.xlu0 %889
    %v892 = vsel %vm293, %v890, 0.0
    %893 = vadd.xlane.f32.xlu0 %v892
    %v894 = vpop.xlane.xlu0 %893
    %v895 = vadd.f32 %v894, %v321
    %v896 = vsel %vm151, %v895, -inf
    %897 = vmax.xlane.f32.xlu0 %v896
    %v898 = vpop.xlane.xlu0 %897
    %v899 = vsub.f32 %v895, %v898
    %v900 = vmul.f32 %v899, 1.442695
    %v901 = vpow.pop %v900
    %v902 = vsel %vm151, %v901, 0.0
    %903 = vadd.xlane.f32.xlu0 %v902
    %v904 = vpop.xlane.xlu0 %903
    %v905 = vrcp.pop %v904
    %v906 = vmul.f32 %v901, %v905
    %v907 = vrot.slane %v74, 6
    %v908 = vrot.slane %v75, 5
    %v909 = vsel %vm144, %v908, %v907
    %v910 = vrot.slane %v76, 4
    %v911 = vsel %vm146, %v910, %v909
    %v912 = vrot.slane %v77, 3
    %v913 = vsel %vm148, %v912, %v911
    %v915 = vmul.f32 %v906, %v913
    %916 = vrot.lane.b32.xlu0 %v870, 32
    %v917 = vpop.permute.xlu0 %916
    %v918 = vsel %vm132, %v917, 0
    %920 = vmatpush.msra.mxu0 0.0
    %921 = vmatpush.msra.mxu0 0.0
    %922 = vmatpush.msra.mxu0 0.0
    %923 = vmatpush.msra.mxu0 0.0
    %924 = vmatpush.msra.mxu0 0.0
    %925 = vmatpush.msra.mxu0 0.0
    %926 = vmatpush.msra.mxu0 0.0
    %927 = vmatpush.msra.mxu0 0.0
    %928 = vmatpush.msra.mxu0 0.0
    %929 = vmatpush.msra.mxu0 0.0
    %930 = vmatpush.msra.mxu0 0.0
    %931 = vmatpush.msra.mxu0 0.0
    %932 = vmatpush.msra.mxu0 %v72
    %933 = vmatpush.msra.mxu0 %v71
    %934 = vmatpush.msra.mxu0 %v70
    %935 = vmatpush.msra.mxu0 %v69
    %936 = vmatmul.f32.gmra.mxu0 %v918
    %v937 = vpop.f32.mrf.mxu0
    %v938 = vadd.f32 0.0, %v937
    %939 = vdwg.mxu0
    %v941 = vsel %vm88, %v915, 0
    %943 = vmatpush.msra.mxu0 0.0
    %944 = vmatpush.msra.mxu0 0.0
    %945 = vmatpush.msra.mxu0 0.0
    %946 = vmatpush.msra.mxu0 0.0
    %947 = vmatpush.msra.mxu0 0.0
    %948 = vmatpush.msra.mxu0 0.0
    %949 = vmatpush.msra.mxu0 0.0
    %950 = vmatpush.msra.mxu0 0.0
    %951 = vmatpush.msra.mxu0 0.0
    %952 = vmatpush.msra.mxu0 0.0
    %953 = vmatpush.msra.mxu0 0.0
    %954 = vmatpush.msra.mxu0 0.0
    %955 = vmatpush.msra.mxu0 0.0
    %956 = vmatpush.msra.mxu0 0.0
    %957 = vmatpush.msra.mxu0 0.0
    %958 = vmatpush.msra.mxu0 %v68
    %959 = vmatmul.f32.gmra.mxu0 %v941
    %v960 = vpop.f32.mrf.mxu0
    %v961 = vadd.f32 %v938, %v960
    %962 = vdwg.mxu0
    %v963 = vadd.f32 %v961, %v262
    %v964 = vmul.f32 %v963, 0.5
    %v965 = vtanh.pop %v964
    %v966 = vadd.f32 %v965, 1.0
    %v967 = vmul.f32 %v966, 0.5
    %v968 = vtanh.pop %v963
    %v969 = vmul.f32 %v967, %v864
    %971 = vrot.lane.b32.xlu0 %v968, 64
    %v972 = vpop.permute.xlu0 %971
    %v974 = vmul.f32 %v967, %v972
    %976 = vrot.lane.b32.xlu0 %v974, 32
    %v977 = vpop.permute.xlu0 %976
    %v979 = vadd.f32 %v969, %v977
    %v980 = vtanh.pop %v979
    %982 = vrot.lane.b32.xlu0 %v980, 64
    %v983 = vpop.permute.xlu0 %982
    %v985 = vmul.f32 %v967, %v983
    %986 = vrot.lane.b32.xlu0 %v915, 48
    %v987 = vpop.permute.xlu0 %986
    %vm989 = vcmask 454016
    %990 = vst.msk [vmem:[#allocation8] sm:$0xf] %vm989, %v987
    %992 = vrot.lane.b32.xlu0 %v985, 96
    %v993 = vpop.permute.xlu0 %992
    %995 = vst.msk [vmem:[#allocation9 + $0x4] sm:$0xf] %vm539, %v993
    %v996 = vmul.f32 %v985, %v296
    %v997 = vmul.f32 %v979, %v300
    %999 = vrot.lane.b32.xlu0 %v997, 64
    %v1000 = vpop.permute.xlu0 %999
    %v1002 = vadd.f32 %v996, %v1000
    %1004 = vrot.lane.b32.xlu0 %v1002, 32
    %v1005 = vpop.permute.xlu0 %1004
    %v1007 = vsel %vm293, %v1005, 0.0
    %1008 = vadd.xlane.f32.xlu0 %v1007
    %v1009 = vpop.xlane.xlu0 %1008
    %v1010 = vadd.f32 %v1009, %v321
    %v1011 = vsel %vm151, %v1010, -inf
    %1012 = vmax.xlane.f32.xlu0 %v1011
    %v1013 = vpop.xlane.xlu0 %1012
    %v1014 = vsub.f32 %v1010, %v1013
    %v1015 = vmul.f32 %v1014, 1.442695
    %v1016 = vpow.pop %v1015
    %v1017 = vsel %vm151, %v1016, 0.0
    %1018 = vadd.xlane.f32.xlu0 %v1017
    %v1019 = vpop.xlane.xlu0 %1018
    %v1020 = vrcp.pop %v1019
    %v1021 = vmul.f32 %v1016, %v1020
    %v1022 = vrot.slane %v74, 7
    %v1023 = vrot.slane %v75, 6
    %v1024 = vsel %vm144, %v1023, %v1022
    %v1025 = vrot.slane %v76, 5
    %v1026 = vsel %vm146, %v1025, %v1024
    %v1027 = vrot.slane %v77, 4
    %v1028 = vsel %vm148, %v1027, %v1026
    %v1030 = vmul.f32 %v1021, %v1028
    %1031 = vrot.lane.b32.xlu0 %v985, 32
    %v1032 = vpop.permute.xlu0 %1031
    %v1033 = vsel %vm132, %v1032, 0
    %1035 = vmatpush.msra.mxu0 0.0
    %1036 = vmatpush.msra.mxu0 0.0
    %1037 = vmatpush.msra.mxu0 0.0
    %1038 = vmatpush.msra.mxu0 0.0
    %1039 = vmatpush.msra.mxu0 0.0
    %1040 = vmatpush.msra.mxu0 0.0
    %1041 = vmatpush.msra.mxu0 0.0
    %1042 = vmatpush.msra.mxu0 0.0
    %1043 = vmatpush.msra.mxu0 0.0
    %1044 = vmatpush.msra.mxu0 0.0
    %1045 = vmatpush.msra.mxu0 0.0
    %1046 = vmatpush.msra.mxu0 0.0
    %1047 = vmatpush.msra.mxu0 %v72
    %1048 = vmatpush.msra.mxu0 %v71
    %1049 = vmatpush.msra.mxu0 %v70
    %1050 = vmatpush.msra.mxu0 %v69
    %1051 = vmatmul.f32.gmra.mxu0 %v1033
    %v1052 = vpop.f32.mrf.mxu0
    %v1053 = vadd.f32 0.0, %v1052
    %1054 = vdwg.mxu0
    %v1056 = vsel %vm88, %v1030, 0
    %1058 = vmatpush.msra.mxu0 0.0
    %1059 = vmatpush.msra.mxu0 0.0
    %1060 = vmatpush.msra.mxu0 0.0
    %1061 = vmatpush.msra.mxu0 0.0
    %1062 = vmatpush.msra.mxu0 0.0
    %1063 = vmatpush.msra.mxu0 0.0
    %1064 = vmatpush.msra.mxu0 0.0
    %1065 = vmatpush.msra.mxu0 0.0
    %1066 = vmatpush.msra.mxu0 0.0
    %1067 = vmatpush.msra.mxu0 0.0
    %1068 = vmatpush.msra.mxu0 0.0
    %1069 = vmatpush.msra.mxu0 0.0
    %1070 = vmatpush.msra.mxu0 0.0
    %1071 = vmatpush.msra.mxu0 0.0
    %1072 = vmatpush.msra.mxu0 0.0
    %1073 = vmatpush.msra.mxu0 %v68
    %1074 = vmatmul.f32.gmra.mxu0 %v1056
    %v1075 = vpop.f32.mrf.mxu0
    %v1076 = vadd.f32 %v1053, %v1075
    %1077 = vdwg.mxu0
    %v1078 = vadd.f32 %v1076, %v262
    %v1079 = vmul.f32 %v1078, 0.5
    %v1080 = vtanh.pop %v1079
    %v1081 = vadd.f32 %v1080, 1.0
    %v1082 = vmul.f32 %v1081, 0.5
    %v1083 = vtanh.pop %v1078
    %v1084 = vmul.f32 %v1082, %v979
    %1086 = vrot.lane.b32.xlu0 %v1083, 64
    %v1087 = vpop.permute.xlu0 %1086
    %v1089 = vmul.f32 %v1082, %v1087
    %1091 = vrot.lane.b32.xlu0 %v1089, 32
    %v1092 = vpop.permute.xlu0 %1091
    %v1094 = vadd.f32 %v1084, %v1092
    %v1095 = vtanh.pop %v1094
    %1097 = vrot.lane.b32.xlu0 %v1095, 64
    %v1098 = vpop.permute.xlu0 %1097
    %v1100 = vmul.f32 %v1082, %v1098
    %1101 = vrot.lane.b32.xlu0 %v1030, 56
    %v1102 = vpop.permute.xlu0 %1101
    %vm1104 = vcmask 519616
    %1105 = vst.msk [vmem:[#allocation8] sm:$0xf] %vm1104, %v1102
    %1106 = vst.msk [vmem:[#allocation9 + $0x4] sm:$0xf] %vm650, %v1100
    // Predicated region
    $region42: #{tpu_custom_call.1} parent=1 // pred_check
      _
    $region43: #{tpu_custom_call.1} parent=1 // pred_check_branch
      %1108 = sbr.rel (0) target = $region45
    $region44: #{tpu_custom_call.1} parent=1 // pred_region
      %1110 = vsyncadd [#allocation5], 0
      %s1112 = sshll.u32 [#allocation8], 4
      %s1113 = int_to_ptr.vmem [resolvable:$true] %s1112
      %s1114 = sshll.u32 %s8, 4
      %s1115 = int_to_ptr.hbm [resolvable:$true] %s1114
      %1117 = dma.vmem_to_hbm [thread:$0]  %s1113, 64, %s1115, [#allocation5]
    $region45: #{tpu_custom_call.1} parent=1 // pred_fallthru
      _
    // Predicated region
    $region46: #{tpu_custom_call.1} parent=1 // pred_check
      _
    $region47: #{tpu_custom_call.1} parent=1 // pred_check_branch
      %1119 = sbr.rel (0) target = $region49
    $region48: #{tpu_custom_call.1} parent=1 // pred_region
      %1121 = vsyncadd [#allocation10], 0
      %s1123 = sshll.u32 [#allocation9], 4
      %s1124 = int_to_ptr.vmem [resolvable:$true] %s1123
      %s1125 = sshll.u32 %s9, 4
      %s1126 = int_to_ptr.hbm [resolvable:$true] %s1125
      %1128 = dma.vmem_to_hbm [thread:$0]  %s1124, 128, %s1126, [#allocation10]
    $region49: #{tpu_custom_call.1} parent=1 // pred_fallthru
      _
    // Predicated region
    $region50: #{tpu_custom_call.1} parent=1 // pred_check
      _
    $region51: #{tpu_custom_call.1} parent=1 // pred_check_branch
      %1130 = sbr.rel (0) target = $region53
    $region52: #{tpu_custom_call.1} parent=1 // pred_region
      %1132 = dma.done [#allocation5], 64
    $region53: #{tpu_custom_call.1} parent=1 // pred_fallthru
      _
    // Predicated region
    $region54: #{tpu_custom_call.1} parent=1 // pred_check
      _
    $region55: #{tpu_custom_call.1} parent=1 // pred_check_branch
      %1134 = sbr.rel (0) target = $region57
    $region56: #{tpu_custom_call.1} parent=1 // pred_region
      %1136 = dma.done [#allocation10], 128
    $region57: #{tpu_custom_call.1} parent=1 // pred_fallthru
      _
    %1137 = vsyncpa [#allocation4], 1
    %1138 = vsyncpa [#allocation7], 1
    %1139 = vsyncpa [#allocation5], 1
    %1140 = vsyncpa [#allocation10], 1

</llo_original>
